<compile_context>
chip_gen: v7x
topology: tpu7x:2x2x1
jax: 0.10.0
libtpu: 0.0.40
codegen_flags: <defaults>
</compile_context>

<pallas_src>
import jax
import jax.numpy as jnp
from jax.experimental import pallas as pl
from jax.experimental.pallas import tpu as pltpu

EMBED_DIM = 128            # small lane-aligned stand-in for embed_dim = 768
GRID_HW = 14               # the reference forward() hard-codes the 14x14 token grid
_SQRT_HALF = 0.7071067811865476
_VMEM_LIMIT = 48 * 1024 * 1024


# ---------------------------------------------------------------------------
# Kernels
# ---------------------------------------------------------------------------
def _deconv_flat_kernel(x_ref, w_ref, b_ref, o_ref):
    """ConvTranspose2d(k=2,s=2) as one fused-tap matmul on an M-tile.

    x: (TM, Cin) f32/bf16 (cast to bf16 in-kernel), w: (Cin, 4*Cout) bf16,
    b: (1, 4*Cout) f32.  Column block k = 2*ki + kj holds output pixel (2h+ki, 2w+kj).
    """
    o_ref[...] = (jnp.dot(x_ref[...].astype(jnp.bfloat16), w_ref[...],
                          preferred_element_type=jnp.float32)
                  + b_ref[...]).astype(o_ref.dtype)


def _deconv_lngelu_deconv_kernel(x_ref, w1_ref, b1_ref, g_ref, bt_ref,
                                 w3_ref, b3_ref, y_ref, d3_ref):
    """Fused bigger-FPN stage on an M-tile of the shared token map.

    out0 (y):  deconv1 -> Norm2d (LayerNorm over C, eps=1e-6) -> exact GELU, emitted bf16.
    out1 (d3): deconv3 (raw), emitted f32.
    """
    xb = x_ref[...].astype(jnp.bfloat16)
    acc1 = (jnp.dot(xb, w1_ref[...], preferred_element_type=jnp.float32) + b1_ref[...])
    C = g_ref.shape[-1]
    for k in range(4):                       # per-tap, lane-aligned channel groups
        yk = acc1[:, k * C:(k + 1) * C]
        mu = jnp.mean(yk, axis=-1, keepdims=True)
        yc = yk - mu
        var = jnp.mean(yc * yc, axis=-1, keepdims=True)
        yn = yc * jax.lax.rsqrt(var + 1e-6) * g_ref[...] + bt_ref[...]
        y_ref[:, k * C:(k + 1) * C] = (
            0.5 * yn * (1.0 + jax.lax.erf(yn * _SQRT_HALF))).astype(y_ref.dtype)
    d3_ref[...] = (jnp.dot(xb, w3_ref[...],
                           preferred_element_type=jnp.float32) + b3_ref[...])


def _deconv_pool_kernel(x_ref, w_ref, b_ref, od_ref, op_ref):
    """Default path: deconv-taps matmul + 2x2/2 maxpool of the SAME (single) f32 block.

    x: (1, 196, C) f32, row r = 14*h + w.  Pool stays in f32 (exact); only the matmul
    operand is cast to bf16.
    """
    od_ref[0] = (jnp.dot(x_ref[0].astype(jnp.bfloat16), w_ref[...],
                         preferred_element_type=jnp.float32) + b_ref[...])
    for ho in range(7):
        top = x_ref[0, 28 * ho:28 * ho + 14, :]          # h = 2*ho,   all w
        bot = x_ref[0, 28 * ho + 14:28 * ho + 28, :]     # h = 2*ho+1, all w
        vmax = jnp.maximum(top, bot)                     # (14, C) f32
        for wo in range(7):
            op_ref[0, 7 * ho + wo, :] = jnp.maximum(vmax[2 * wo], vmax[2 * wo + 1])


def _double_pool_kernel(x_ref, p1_ref, p2_ref):
    """use_bigger_fpns==-1: maxpool(2,2) and maxpool(maxpool) in one pass (p1 kept in VMEM)."""
    rows = []
    for ho in range(7):
        top = x_ref[0, 28 * ho:28 * ho + 14, :]
        bot = x_ref[0, 28 * ho + 14:28 * ho + 28, :]
        vmax = jnp.maximum(top, bot)
        r = []
        for wo in range(7):
            v = jnp.maximum(vmax[2 * wo], vmax[2 * wo + 1])
            p1_ref[0, 7 * ho + wo, :] = v
            r.append(v)
        rows.append(r)
    for i in range(3):
        for j in range(3):
            p2_ref[0, 3 * i + j, :] = jnp.maximum(
                jnp.maximum(rows[2 * i][2 * j], rows[2 * i][2 * j + 1]),
                jnp.maximum(rows[2 * i + 1][2 * j], rows[2 * i + 1][2 * j + 1]))


# ---------------------------------------------------------------------------
# Wrappers
# ---------------------------------------------------------------------------
def _fused_tap_weights(weight, bias):
    """PyTorch ConvTranspose2d weight (Cin,Cout,2,2) -> (Cin, 4*Cout) bf16 + tiled f32 bias."""
    Cin, Cout = weight.shape[0], weight.shape[1]
    wf = jnp.transpose(weight, (0, 2, 3, 1)).reshape(Cin, 4 * Cout).astype(jnp.bfloat16)
    bf = jnp.tile(bias.astype(jnp.float32), 4).reshape(1, 4 * Cout)
    return wf, bf


def _scatter_taps_nchw(d_flat, B, H, W, Cout):
    """(..., H*W, 4*Cout) -> (B, Cout, 2H, 2W) with one XLA transpose."""
    d6 = d_flat.reshape(B, H, W, 2, 2, Cout)              # (b, h, w, ki, kj, c)
    return d6.transpose(0, 5, 1, 3, 2, 4).reshape(B, Cout, 2 * H, 2 * W)


def _pick_tm(M):
    return 256 if M > 256 else 128


def _pad_rows(x2, tm):
    M = x2.shape[0]
    Mp = ((M + tm - 1) // tm) * tm
    if Mp != M:
        x2 = jnp.pad(x2, ((0, Mp - M), (0, 0)))
    return x2, Mp


def deconv_flat(x_flat, wf, bf, out_dtype=jnp.float32):
    """M-tiled ConvTranspose2d(k=2,s=2) taps matmul: (M, Cin) -> (M, 4*Cout)."""
    M, Cin = x_flat.shape
    C4 = wf.shape[1]
    tm = _pick_tm(M)
    xp, Mp = _pad_rows(x_flat, tm)
    out = pl.pallas_call(
        _deconv_flat_kernel,
        out_shape=jax.ShapeDtypeStruct((Mp, C4), out_dtype),
        grid=(Mp // tm,),
        in_specs=[
            pl.BlockSpec((tm, Cin), lambda m: (m, 0)),
            pl.BlockSpec((Cin, C4), lambda m: (0, 0)),
            pl.BlockSpec((1, C4), lambda m: (0, 0)),
        ],
        out_specs=pl.BlockSpec((tm, C4), lambda m: (m, 0)),
        compiler_params=pltpu.CompilerParams(
            dimension_semantics=("parallel",), vmem_limit_bytes=_VMEM_LIMIT),
    )(xp, wf, bf)
    return out[:M] if Mp != M else out


def deconv_lngelu_and_deconv(x_flat, wf1, bf1, g2d, bt2d, wf3, bf3):
    """Fused [deconv1 -> Norm2d -> GELU] (bf16) and [deconv3] (f32) over one M-tiled grid."""
    M, Cin = x_flat.shape
    C4 = wf1.shape[1]
    tm = _pick_tm(M)
    xp, Mp = _pad_rows(x_flat, tm)
    y, d3 = pl.pallas_call(
        _deconv_lngelu_deconv_kernel,
        out_shape=(jax.ShapeDtypeStruct((Mp, C4), jnp.bfloat16),
                   jax.ShapeDtypeStruct((Mp, C4), jnp.float32)),
        grid=(Mp // tm,),
        in_specs=[
            pl.BlockSpec((tm, Cin), lambda m: (m, 0)),
            pl.BlockSpec((Cin, C4), lambda m: (0, 0)),
            pl.BlockSpec((1, C4), lambda m: (0, 0)),
            pl.BlockSpec((1, g2d.shape[1]), lambda m: (0, 0)),
            pl.BlockSpec((1, bt2d.shape[1]), lambda m: (0, 0)),
            pl.BlockSpec((Cin, C4), lambda m: (0, 0)),
            pl.BlockSpec((1, C4), lambda m: (0, 0)),
        ],
        out_specs=(pl.BlockSpec((tm, C4), lambda m: (m, 0)),
                   pl.BlockSpec((tm, C4), lambda m: (m, 0))),
        compiler_params=pltpu.CompilerParams(
            dimension_semantics=("parallel",), vmem_limit_bytes=_VMEM_LIMIT),
    )(xp, wf1, bf1, g2d, bt2d, wf3, bf3)
    if Mp != M:
        y, d3 = y[:M], d3[:M]
    return y, d3


def deconv_and_pool_fused(tokens, wf, bf):
    """Default path: deconv taps + 2x2 maxpool of the same 14x14 map in ONE pallas_call."""
    B, HW, C = tokens.shape
    C4 = wf.shape[1]
    d_flat, pool = pl.pallas_call(
        _deconv_pool_kernel,
        out_shape=(jax.ShapeDtypeStruct((B, HW, C4), jnp.float32),
                   jax.ShapeDtypeStruct((B, 49, C), tokens.dtype)),
        grid=(B,),
        in_specs=[
            pl.BlockSpec((1, HW, C), lambda b: (b, 0, 0)),
            pl.BlockSpec((C, C4), lambda b: (0, 0)),
            pl.BlockSpec((1, C4), lambda b: (0, 0)),
        ],
        out_specs=(pl.BlockSpec((1, HW, C4), lambda b: (b, 0, 0)),
                   pl.BlockSpec((1, 49, C), lambda b: (b, 0, 0))),
        compiler_params=pltpu.CompilerParams(
            dimension_semantics=("parallel",), vmem_limit_bytes=_VMEM_LIMIT),
    )(tokens, wf, bf)
    return d_flat, pool


def double_max_pool(tokens):
    """use_bigger_fpns==-1: p1 = maxpool(x), p2 = maxpool(p1), one launch."""
    B, HW, C = tokens.shape
    return pl.pallas_call(
        _double_pool_kernel,
        out_shape=(jax.ShapeDtypeStruct((B, 49, C), tokens.dtype),
                   jax.ShapeDtypeStruct((B, 9, C), tokens.dtype)),
        grid=(B,),
        in_specs=[pl.BlockSpec((1, HW, C), lambda b: (b, 0, 0))],
        out_specs=(pl.BlockSpec((1, 49, C), lambda b: (b, 0, 0)),
                   pl.BlockSpec((1, 9, C), lambda b: (b, 0, 0))),
        compiler_params=pltpu.CompilerParams(
            dimension_semantics=("parallel",), vmem_limit_bytes=_VMEM_LIMIT),
    )(tokens)


# ---------------------------------------------------------------------------
# Module wrapper
# ---------------------------------------------------------------------------
class ViTYOLOv3HeadPallas:
    def __init__(self, embed_dim=EMBED_DIM, use_bigger_fpns=0, seed=0):
        self.embed_dim = embed_dim
        self.use_bigger_fpns = use_bigger_fpns
        C = embed_dim
        ks = jax.random.split(jax.random.PRNGKey(seed), 6)
        # ConvTranspose2d params in PyTorch layout (Cin, Cout, 2, 2), deterministic init.
        self.w_ct1 = 0.02 * jax.random.normal(ks[0], (C, C, 2, 2), jnp.float32)
        self.b_ct1 = 0.01 * jax.random.normal(ks[1], (C,), jnp.float32)
        self.w_ct2 = 0.02 * jax.random.normal(ks[2], (C, C, 2, 2), jnp.float32)
        self.b_ct2 = 0.01 * jax.random.normal(ks[3], (C,), jnp.float32)
        self.w_ct3 = 0.02 * jax.random.normal(ks[4], (C, C, 2, 2), jnp.float32)
        self.b_ct3 = 0.01 * jax.random.normal(ks[5], (C,), jnp.float32)
        self.ln_gamma = jnp.ones((C,), jnp.float32)      # Norm2d LayerNorm affine
        self.ln_beta = jnp.zeros((C,), jnp.float32)
        # Pre-fused tap weights (done once, not per forward).
        self.wf1, self.bf1 = _fused_tap_weights(self.w_ct1, self.b_ct1)
        self.wf2, self.bf2 = _fused_tap_weights(self.w_ct2, self.b_ct2)
        self.wf3, self.bf3 = _fused_tap_weights(self.w_ct3, self.b_ct3)
        self.g2d = self.ln_gamma.reshape(1, C)
        self.bt2d = self.ln_beta.reshape(1, C)

    def forward(self, input_images, x, targets=None):
        B = input_images.shape[0]
        C = self.embed_dim
        H = GRID_HW
        # Drop CLS token; (B, 196, C) tokens are the channels-last view of the 14x14 map.
        tokens = x[-1][:, 1:, :]

        if self.use_bigger_fpns == 1:
            # [deconv -> Norm2d -> GELU -> deconv,  deconv,  Identity]
            xf = tokens.reshape(B * H * H, C)
            y, d3 = deconv_lngelu_and_deconv(xf, self.wf1, self.bf1,
                                             self.g2d, self.bt2d, self.wf3, self.bf3)
            # Second deconv consumes the bf16 intermediate row-wise (no spatial scatter).
            d2 = deconv_flat(y.reshape(B * H * H * 4, C), self.wf2, self.bf2)
            b0 = (d2.reshape(B, H, H, 2, 2, 2, 2, C)
                    .transpose(0, 7, 1, 3, 5, 2, 4, 6).reshape(B, C, 4 * H, 4 * H))
            b1 = _scatter_taps_nchw(d3, B, H, H, C)
            b2 = tokens.transpose(0, 2, 1).reshape(B, C, H, H)
        elif self.use_bigger_fpns == -1:
            # [Identity,  maxpool,  maxpool o maxpool]
            p1, p2 = double_max_pool(tokens)
            b0 = tokens.transpose(0, 2, 1).reshape(B, C, H, H)
            b1 = p1.reshape(B, 7, 7, C).transpose(0, 3, 1, 2)
            b2 = p2.reshape(B, 3, 3, C).transpose(0, 3, 1, 2)
        else:
            # default: [ConvTranspose2d(k=2,s=2),  Identity,  MaxPool2d(k=2,s=2)]
            d_flat, pool = deconv_and_pool_fused(tokens, self.wf1, self.bf1)
            b0 = _scatter_taps_nchw(d_flat, B, H, H, C)
            b1 = tokens.transpose(0, 2, 1).reshape(B, C, H, H)
            b2 = pool.reshape(B, 7, 7, C).transpose(0, 3, 1, 2)
        # self.fpn = nn.Identity()
        # TODO(synk): YOLOXHead not provided in the reference source; return FPN features (NCHW).
        return (b0, b1, b2)


if __name__ == "__main__":
    B = 2
    key = jax.random.PRNGKey(0)
    k_img, k_tok = jax.random.split(key)
    # input_images only contributes its batch size in the reference forward()
    input_images = jax.random.normal(k_img, (B, 3, 28, 28), jnp.float32)
    toks = jax.random.normal(
        k_tok, (3, B, GRID_HW * GRID_HW + 1, EMBED_DIM), jnp.float32)
    x = [toks[i] for i in range(3)]                      # 3 ViT levels (B, 1+196, C)

    f = x[-1][:, 1:, :].reshape(B, GRID_HW, GRID_HW, EMBED_DIM)   # NHWC reference map

    def ref_deconv(xm_nhwc, w, b):       # f32 reference ConvTranspose2d(k=2,s=2) -> NCHW
        Bq, Hh, Ww, _ = xm_nhwc.shape
        y = jnp.einsum('bhwi,iokl->bohkwl', xm_nhwc, w,
                       precision=jax.lax.Precision.HIGHEST)
        return y.reshape(Bq, EMBED_DIM, 2 * Hh, 2 * Ww) + b[None, :, None, None]

    ref_id = jnp.transpose(f, (0, 3, 1, 2))
    ref_p1 = jnp.max(f.reshape(B, 7, 2, 7, 2, EMBED_DIM), axis=(2, 4))
    ref_p2 = jnp.max(ref_p1[:, :6, :6, :].reshape(B, 3, 2, 3, 2, EMBED_DIM), axis=(2, 4))

    # --- default path -------------------------------------------------------
    head = ViTYOLOv3HeadPallas(embed_dim=EMBED_DIM, use_bigger_fpns=0, seed=0)
    b0, b1, b2 = jax.block_until_ready(head.forward(input_images, x))
    assert b0.shape == (B, EMBED_DIM, 28, 28)
    assert b1.shape == (B, EMBED_DIM, 14, 14)
    assert b2.shape == (B, EMBED_DIM, 7, 7)
    assert all(o.dtype == jnp.float32 for o in (b0, b1, b2))
    assert float(jnp.max(jnp.abs(b0 - ref_deconv(f, head.w_ct1, head.b_ct1)))) < 5e-2
    assert float(jnp.max(jnp.abs(b1 - ref_id))) < 1e-6
    assert float(jnp.max(jnp.abs(b2 - jnp.transpose(ref_p1, (0, 3, 1, 2))))) < 1e-6

    # --- use_bigger_fpns == -1 ----------------------------------------------
    head_m = ViTYOLOv3HeadPallas(embed_dim=EMBED_DIM, use_bigger_fpns=-1, seed=0)
    c0, c1, c2 = jax.block_until_ready(head_m.forward(input_images, x))
    assert c0.shape == (B, EMBED_DIM, 14, 14)
    assert c1.shape == (B, EMBED_DIM, 7, 7)
    assert c2.shape == (B, EMBED_DIM, 3, 3)
    assert float(jnp.max(jnp.abs(c0 - ref_id))) < 1e-6
    assert float(jnp.max(jnp.abs(c1 - jnp.transpose(ref_p1, (0, 3, 1, 2))))) < 1e-6
    assert float(jnp.max(jnp.abs(c2 - jnp.transpose(ref_p2, (0, 3, 1, 2))))) < 1e-6

    # --- use_bigger_fpns == 1 -----------------------------------------------
    head_p = ViTYOLOv3HeadPallas(embed_dim=EMBED_DIM, use_bigger_fpns=1, seed=0)
    a0, a1, a2 = jax.block_until_ready(head_p.forward(input_images, x))
    assert a0.shape == (B, EMBED_DIM, 56, 56)
    assert a1.shape == (B, EMBED_DIM, 28, 28)
    assert a2.shape == (B, EMBED_DIM, 14, 14)
    y1 = jnp.transpose(ref_deconv(f, head_p.w_ct1, head_p.b_ct1), (0, 2, 3, 1))  # NHWC
    mu = jnp.mean(y1, axis=-1, keepdims=True)
    var = jnp.mean((y1 - mu) ** 2, axis=-1, keepdims=True)
    yn = (y1 - mu) * jax.lax.rsqrt(var + 1e-6) * head_p.ln_gamma + head_p.ln_beta
    yg = 0.5 * yn * (1.0 + jax.lax.erf(yn * _SQRT_HALF))
    assert float(jnp.max(jnp.abs(a0 - ref_deconv(yg, head_p.w_ct2, head_p.b_ct2)))) < 5e-2
    assert float(jnp.max(jnp.abs(a1 - ref_deconv(f, head_p.w_ct3, head_p.b_ct3)))) < 5e-2
    assert float(jnp.max(jnp.abs(a2 - ref_id))) < 1e-6

    print("KERNEL_OK")
</pallas_src>

<mosaic_0001>
module attributes {stable_mosaic.version = 11 : i64} {
  func.func @_deconv_pool_kernel(%arg0: i32, %arg1: memref<1x196x128xf32, #tpu.memory_space<vmem>>, %arg2: memref<128x512xbf16, #tpu.memory_space<vmem>>, %arg3: memref<1x512xf32, #tpu.memory_space<vmem>>, %arg4: memref<1x196x512xf32, #tpu.memory_space<vmem>>, %arg5: memref<1x49x128xf32, #tpu.memory_space<vmem>>) attributes {dimension_semantics = [#tpu.dimension_semantics<parallel>], iteration_bounds = array<i64: 2>, scalar_prefetch = 0 : i64, scratch_operands = 0 : i64, tpu.core_type = #tpu.core_type<tc>, window_params = [{transform_indices = @transform_0, window_bounds = array<i64: 1, 196, 128>}, {pipeline_mode = #tpu.pipeline_mode<synchronous>, transform_indices = @transform_1, window_bounds = array<i64: 128, 512>}, {pipeline_mode = #tpu.pipeline_mode<synchronous>, transform_indices = @transform_2, window_bounds = array<i64: 1, 512>}, {transform_indices = @transform_3, window_bounds = array<i64: 1, 196, 512>}, {transform_indices = @transform_4, window_bounds = array<i64: 1, 49, 128>}]} {
    %c0 = arith.constant 0 : index
    %c0_0 = arith.constant 0 : index
    %c0_1 = arith.constant 0 : index
    %0 = vector.load %arg1[%c0, %c0_0, %c0_1] : memref<1x196x128xf32, #tpu.memory_space<vmem>>, vector<1x196x128xf32>
    %1 = vector.shape_cast %0 : vector<1x196x128xf32> to vector<196x128xf32>
    %2 = arith.truncf %1 : vector<196x128xf32> to vector<196x128xbf16>
    %c0_2 = arith.constant 0 : index
    %c0_3 = arith.constant 0 : index
    %3 = vector.load %arg2[%c0_2, %c0_3] : memref<128x512xbf16, #tpu.memory_space<vmem>>, vector<128x512xbf16>
    %cst = arith.constant dense<0.000000e+00> : vector<196x512xf32>
    %4 = tpu.matmul %2, %3, %cst {dimension_numbers = #tpu.dot_dimension_numbers<[1], [0], [0], [1], [0, 0, 1, 1], [], []>} : vector<196x128xbf16>, vector<128x512xbf16>, vector<196x512xf32> -> vector<196x512xf32>
    %c0_4 = arith.constant 0 : index
    %c0_5 = arith.constant 0 : index
    %5 = vector.load %arg3[%c0_4, %c0_5] : memref<1x512xf32, #tpu.memory_space<vmem>>, vector<1x512xf32>
    %6 = vector.broadcast %5 : vector<1x512xf32> to vector<196x512xf32>
    %7 = arith.addf %4, %6 : vector<196x512xf32>
    %c0_6 = arith.constant 0 : index
    %c0_7 = arith.constant 0 : index
    %c0_8 = arith.constant 0 : index
    %8 = vector.load %arg4[%c0_6, %c0_7, %c0_8] : memref<1x196x512xf32, #tpu.memory_space<vmem>>, vector<1x196x512xf32>
    %9 = vector.shape_cast %8 : vector<1x196x512xf32> to vector<196x512xf32>
    %10 = vector.shape_cast %7 : vector<196x512xf32> to vector<1x196x512xf32>
    tpu.vector_store %arg4[%c0_6, %c0_7, %c0_8], %10 {strides = array<i32>} : memref<1x196x512xf32, #tpu.memory_space<vmem>>, vector<1x196x512xf32>,
    %c0_9 = arith.constant 0 : index
    %c0_10 = arith.constant 0 : index
    %c0_11 = arith.constant 0 : index
    %11 = vector.load %arg1[%c0_9, %c0_10, %c0_11] : memref<1x196x128xf32, #tpu.memory_space<vmem>>, vector<1x14x128xf32>
    %12 = vector.shape_cast %11 : vector<1x14x128xf32> to vector<14x128xf32>
    %c0_12 = arith.constant 0 : index
    %c14 = arith.constant 14 : index
    %c0_13 = arith.constant 0 : index
    %13 = vector.load %arg1[%c0_12, %c14, %c0_13] : memref<1x196x128xf32, #tpu.memory_space<vmem>>, vector<1x14x128xf32>
    %14 = vector.shape_cast %13 : vector<1x14x128xf32> to vector<14x128xf32>
    %15 = arith.maximumf %12, %14 : vector<14x128xf32>
    %16 = vector.extract_strided_slice %15 {offsets = [0, 0], sizes = [1, 128], strides = [1, 1]} : vector<14x128xf32> to vector<1x128xf32>
    %17 = vector.shape_cast %16 : vector<1x128xf32> to vector<128xf32>
    %18 = vector.extract_strided_slice %15 {offsets = [1, 0], sizes = [1, 128], strides = [1, 1]} : vector<14x128xf32> to vector<1x128xf32>
    %19 = vector.shape_cast %18 : vector<1x128xf32> to vector<128xf32>
    %20 = arith.maximumf %17, %19 : vector<128xf32>
    %c0_14 = arith.constant 0 : index
    %c0_15 = arith.constant 0 : index
    %c0_16 = arith.constant 0 : index
    %21 = vector.load %arg5[%c0_14, %c0_15, %c0_16] : memref<1x49x128xf32, #tpu.memory_space<vmem>>, vector<1x1x128xf32>
    %22 = vector.shape_cast %21 : vector<1x1x128xf32> to vector<128xf32>
    %23 = vector.shape_cast %20 : vector<128xf32> to vector<1x1x128xf32>
    tpu.vector_store %arg5[%c0_14, %c0_15, %c0_16], %23 {strides = array<i32>} : memref<1x49x128xf32, #tpu.memory_space<vmem>>, vector<1x1x128xf32>,
    %24 = vector.extract_strided_slice %15 {offsets = [2, 0], sizes = [1, 128], strides = [1, 1]} : vector<14x128xf32> to vector<1x128xf32>
    %25 = vector.shape_cast %24 : vector<1x128xf32> to vector<128xf32>
    %26 = vector.extract_strided_slice %15 {offsets = [3, 0], sizes = [1, 128], strides = [1, 1]} : vector<14x128xf32> to vector<1x128xf32>
    %27 = vector.shape_cast %26 : vector<1x128xf32> to vector<128xf32>
    %28 = arith.maximumf %25, %27 : vector<128xf32>
    %c0_17 = arith.constant 0 : index
    %c1 = arith.constant 1 : index
    %c0_18 = arith.constant 0 : index
    %29 = vector.load %arg5[%c0_17, %c1, %c0_18] : memref<1x49x128xf32, #tpu.memory_space<vmem>>, vector<1x1x128xf32>
    %30 = vector.shape_cast %29 : vector<1x1x128xf32> to vector<128xf32>
    %31 = vector.shape_cast %28 : vector<128xf32> to vector<1x1x128xf32>
    tpu.vector_store %arg5[%c0_17, %c1, %c0_18], %31 {strides = array<i32>} : memref<1x49x128xf32, #tpu.memory_space<vmem>>, vector<1x1x128xf32>,
    %32 = vector.extract_strided_slice %15 {offsets = [4, 0], sizes = [1, 128], strides = [1, 1]} : vector<14x128xf32> to vector<1x128xf32>
    %33 = vector.shape_cast %32 : vector<1x128xf32> to vector<128xf32>
    %34 = vector.extract_strided_slice %15 {offsets = [5, 0], sizes = [1, 128], strides = [1, 1]} : vector<14x128xf32> to vector<1x128xf32>
    %35 = vector.shape_cast %34 : vector<1x128xf32> to vector<128xf32>
    %36 = arith.maximumf %33, %35 : vector<128xf32>
    %c0_19 = arith.constant 0 : index
    %c2 = arith.constant 2 : index
    %c0_20 = arith.constant 0 : index
    %37 = vector.load %arg5[%c0_19, %c2, %c0_20] : memref<1x49x128xf32, #tpu.memory_space<vmem>>, vector<1x1x128xf32>
    %38 = vector.shape_cast %37 : vector<1x1x128xf32> to vector<128xf32>
    %39 = vector.shape_cast %36 : vector<128xf32> to vector<1x1x128xf32>
    tpu.vector_store %arg5[%c0_19, %c2, %c0_20], %39 {strides = array<i32>} : memref<1x49x128xf32, #tpu.memory_space<vmem>>, vector<1x1x128xf32>,
    %40 = vector.extract_strided_slice %15 {offsets = [6, 0], sizes = [1, 128], strides = [1, 1]} : vector<14x128xf32> to vector<1x128xf32>
    %41 = vector.shape_cast %40 : vector<1x128xf32> to vector<128xf32>
    %42 = vector.extract_strided_slice %15 {offsets = [7, 0], sizes = [1, 128], strides = [1, 1]} : vector<14x128xf32> to vector<1x128xf32>
    %43 = vector.shape_cast %42 : vector<1x128xf32> to vector<128xf32>
    %44 = arith.maximumf %41, %43 : vector<128xf32>
    %c0_21 = arith.constant 0 : index
    %c3 = arith.constant 3 : index
    %c0_22 = arith.constant 0 : index
    %45 = vector.load %arg5[%c0_21, %c3, %c0_22] : memref<1x49x128xf32, #tpu.memory_space<vmem>>, vector<1x1x128xf32>
    %46 = vector.shape_cast %45 : vector<1x1x128xf32> to vector<128xf32>
    %47 = vector.shape_cast %44 : vector<128xf32> to vector<1x1x128xf32>
    tpu.vector_store %arg5[%c0_21, %c3, %c0_22], %47 {strides = array<i32>} : memref<1x49x128xf32, #tpu.memory_space<vmem>>, vector<1x1x128xf32>,
    %48 = vector.extract_strided_slice %15 {offsets = [8, 0], sizes = [1, 128], strides = [1, 1]} : vector<14x128xf32> to vector<1x128xf32>
    %49 = vector.shape_cast %48 : vector<1x128xf32> to vector<128xf32>
    %50 = vector.extract_strided_slice %15 {offsets = [9, 0], sizes = [1, 128], strides = [1, 1]} : vector<14x128xf32> to vector<1x128xf32>
    %51 = vector.shape_cast %50 : vector<1x128xf32> to vector<128xf32>
    %52 = arith.maximumf %49, %51 : vector<128xf32>
    %c0_23 = arith.constant 0 : index
    %c4 = arith.constant 4 : index
    %c0_24 = arith.constant 0 : index
    %53 = vector.load %arg5[%c0_23, %c4, %c0_24] : memref<1x49x128xf32, #tpu.memory_space<vmem>>, vector<1x1x128xf32>
    %54 = vector.shape_cast %53 : vector<1x1x128xf32> to vector<128xf32>
    %55 = vector.shape_cast %52 : vector<128xf32> to vector<1x1x128xf32>
    tpu.vector_store %arg5[%c0_23, %c4, %c0_24], %55 {strides = array<i32>} : memref<1x49x128xf32, #tpu.memory_space<vmem>>, vector<1x1x128xf32>,
    %56 = vector.extract_strided_slice %15 {offsets = [10, 0], sizes = [1, 128], strides = [1, 1]} : vector<14x128xf32> to vector<1x128xf32>
    %57 = vector.shape_cast %56 : vector<1x128xf32> to vector<128xf32>
    %58 = vector.extract_strided_slice %15 {offsets = [11, 0], sizes = [1, 128], strides = [1, 1]} : vector<14x128xf32> to vector<1x128xf32>
    %59 = vector.shape_cast %58 : vector<1x128xf32> to vector<128xf32>
    %60 = arith.maximumf %57, %59 : vector<128xf32>
    %c0_25 = arith.constant 0 : index
    %c5 = arith.constant 5 : index
    %c0_26 = arith.constant 0 : index
    %61 = vector.load %arg5[%c0_25, %c5, %c0_26] : memref<1x49x128xf32, #tpu.memory_space<vmem>>, vector<1x1x128xf32>
    %62 = vector.shape_cast %61 : vector<1x1x128xf32> to vector<128xf32>
    %63 = vector.shape_cast %60 : vector<128xf32> to vector<1x1x128xf32>
    tpu.vector_store %arg5[%c0_25, %c5, %c0_26], %63 {strides = array<i32>} : memref<1x49x128xf32, #tpu.memory_space<vmem>>, vector<1x1x128xf32>,
    %64 = vector.extract_strided_slice %15 {offsets = [12, 0], sizes = [1, 128], strides = [1, 1]} : vector<14x128xf32> to vector<1x128xf32>
    %65 = vector.shape_cast %64 : vector<1x128xf32> to vector<128xf32>
    %66 = vector.extract_strided_slice %15 {offsets = [13, 0], sizes = [1, 128], strides = [1, 1]} : vector<14x128xf32> to vector<1x128xf32>
    %67 = vector.shape_cast %66 : vector<1x128xf32> to vector<128xf32>
    %68 = arith.maximumf %65, %67 : vector<128xf32>
    %c0_27 = arith.constant 0 : index
    %c6 = arith.constant 6 : index
    %c0_28 = arith.constant 0 : index
    %69 = vector.load %arg5[%c0_27, %c6, %c0_28] : memref<1x49x128xf32, #tpu.memory_space<vmem>>, vector<1x1x128xf32>
    %70 = vector.shape_cast %69 : vector<1x1x128xf32> to vector<128xf32>
    %71 = vector.shape_cast %68 : vector<128xf32> to vector<1x1x128xf32>
    tpu.vector_store %arg5[%c0_27, %c6, %c0_28], %71 {strides = array<i32>} : memref<1x49x128xf32, #tpu.memory_space<vmem>>, vector<1x1x128xf32>,
    %c0_29 = arith.constant 0 : index
    %c28 = arith.constant 28 : index
    %c0_30 = arith.constant 0 : index
    %72 = vector.load %arg1[%c0_29, %c28, %c0_30] : memref<1x196x128xf32, #tpu.memory_space<vmem>>, vector<1x14x128xf32>
    %73 = vector.shape_cast %72 : vector<1x14x128xf32> to vector<14x128xf32>
    %c0_31 = arith.constant 0 : index
    %c42 = arith.constant 42 : index
    %c0_32 = arith.constant 0 : index
    %74 = vector.load %arg1[%c0_31, %c42, %c0_32] : memref<1x196x128xf32, #tpu.memory_space<vmem>>, vector<1x14x128xf32>
    %75 = vector.shape_cast %74 : vector<1x14x128xf32> to vector<14x128xf32>
    %76 = arith.maximumf %73, %75 : vector<14x128xf32>
    %77 = vector.extract_strided_slice %76 {offsets = [0, 0], sizes = [1, 128], strides = [1, 1]} : vector<14x128xf32> to vector<1x128xf32>
    %78 = vector.shape_cast %77 : vector<1x128xf32> to vector<128xf32>
    %79 = vector.extract_strided_slice %76 {offsets = [1, 0], sizes = [1, 128], strides = [1, 1]} : vector<14x128xf32> to vector<1x128xf32>
    %80 = vector.shape_cast %79 : vector<1x128xf32> to vector<128xf32>
    %81 = arith.maximumf %78, %80 : vector<128xf32>
    %c0_33 = arith.constant 0 : index
    %c7 = arith.constant 7 : index
    %c0_34 = arith.constant 0 : index
    %82 = vector.load %arg5[%c0_33, %c7, %c0_34] : memref<1x49x128xf32, #tpu.memory_space<vmem>>, vector<1x1x128xf32>
    %83 = vector.shape_cast %82 : vector<1x1x128xf32> to vector<128xf32>
    %84 = vector.shape_cast %81 : vector<128xf32> to vector<1x1x128xf32>
    tpu.vector_store %arg5[%c0_33, %c7, %c0_34], %84 {strides = array<i32>} : memref<1x49x128xf32, #tpu.memory_space<vmem>>, vector<1x1x128xf32>,
    %85 = vector.extract_strided_slice %76 {offsets = [2, 0], sizes = [1, 128], strides = [1, 1]} : vector<14x128xf32> to vector<1x128xf32>
    %86 = vector.shape_cast %85 : vector<1x128xf32> to vector<128xf32>
    %87 = vector.extract_strided_slice %76 {offsets = [3, 0], sizes = [1, 128], strides = [1, 1]} : vector<14x128xf32> to vector<1x128xf32>
    %88 = vector.shape_cast %87 : vector<1x128xf32> to vector<128xf32>
    %89 = arith.maximumf %86, %88 : vector<128xf32>
    %c0_35 = arith.constant 0 : index
    %c8 = arith.constant 8 : index
    %c0_36 = arith.constant 0 : index
    %90 = vector.load %arg5[%c0_35, %c8, %c0_36] : memref<1x49x128xf32, #tpu.memory_space<vmem>>, vector<1x1x128xf32>
    %91 = vector.shape_cast %90 : vector<1x1x128xf32> to vector<128xf32>
    %92 = vector.shape_cast %89 : vector<128xf32> to vector<1x1x128xf32>
    tpu.vector_store %arg5[%c0_35, %c8, %c0_36], %92 {strides = array<i32>} : memref<1x49x128xf32, #tpu.memory_space<vmem>>, vector<1x1x128xf32>,
    %93 = vector.extract_strided_slice %76 {offsets = [4, 0], sizes = [1, 128], strides = [1, 1]} : vector<14x128xf32> to vector<1x128xf32>
    %94 = vector.shape_cast %93 : vector<1x128xf32> to vector<128xf32>
    %95 = vector.extract_strided_slice %76 {offsets = [5, 0], sizes = [1, 128], strides = [1, 1]} : vector<14x128xf32> to vector<1x128xf32>
    %96 = vector.shape_cast %95 : vector<1x128xf32> to vector<128xf32>
    %97 = arith.maximumf %94, %96 : vector<128xf32>
    %c0_37 = arith.constant 0 : index
    %c9 = arith.constant 9 : index
    %c0_38 = arith.constant 0 : index
    %98 = vector.load %arg5[%c0_37, %c9, %c0_38] : memref<1x49x128xf32, #tpu.memory_space<vmem>>, vector<1x1x128xf32>
    %99 = vector.shape_cast %98 : vector<1x1x128xf32> to vector<128xf32>
    %100 = vector.shape_cast %97 : vector<128xf32> to vector<1x1x128xf32>
    tpu.vector_store %arg5[%c0_37, %c9, %c0_38], %100 {strides = array<i32>} : memref<1x49x128xf32, #tpu.memory_space<vmem>>, vector<1x1x128xf32>,
    %101 = vector.extract_strided_slice %76 {offsets = [6, 0], sizes = [1, 128], strides = [1, 1]} : vector<14x128xf32> to vector<1x128xf32>
    %102 = vector.shape_cast %101 : vector<1x128xf32> to vector<128xf32>
    %103 = vector.extract_strided_slice %76 {offsets = [7, 0], sizes = [1, 128], strides = [1, 1]} : vector<14x128xf32> to vector<1x128xf32>
    %104 = vector.shape_cast %103 : vector<1x128xf32> to vector<128xf32>
    %105 = arith.maximumf %102, %104 : vector<128xf32>
    %c0_39 = arith.constant 0 : index
    %c10 = arith.constant 10 : index
    %c0_40 = arith.constant 0 : index
    %106 = vector.load %arg5[%c0_39, %c10, %c0_40] : memref<1x49x128xf32, #tpu.memory_space<vmem>>, vector<1x1x128xf32>
    %107 = vector.shape_cast %106 : vector<1x1x128xf32> to vector<128xf32>
    %108 = vector.shape_cast %105 : vector<128xf32> to vector<1x1x128xf32>
    tpu.vector_store %arg5[%c0_39, %c10, %c0_40], %108 {strides = array<i32>} : memref<1x49x128xf32, #tpu.memory_space<vmem>>, vector<1x1x128xf32>,
    %109 = vector.extract_strided_slice %76 {offsets = [8, 0], sizes = [1, 128], strides = [1, 1]} : vector<14x128xf32> to vector<1x128xf32>
    %110 = vector.shape_cast %109 : vector<1x128xf32> to vector<128xf32>
    %111 = vector.extract_strided_slice %76 {offsets = [9, 0], sizes = [1, 128], strides = [1, 1]} : vector<14x128xf32> to vector<1x128xf32>
    %112 = vector.shape_cast %111 : vector<1x128xf32> to vector<128xf32>
    %113 = arith.maximumf %110, %112 : vector<128xf32>
    %c0_41 = arith.constant 0 : index
    %c11 = arith.constant 11 : index
    %c0_42 = arith.constant 0 : index
    %114 = vector.load %arg5[%c0_41, %c11, %c0_42] : memref<1x49x128xf32, #tpu.memory_space<vmem>>, vector<1x1x128xf32>
    %115 = vector.shape_cast %114 : vector<1x1x128xf32> to vector<128xf32>
    %116 = vector.shape_cast %113 : vector<128xf32> to vector<1x1x128xf32>
    tpu.vector_store %arg5[%c0_41, %c11, %c0_42], %116 {strides = array<i32>} : memref<1x49x128xf32, #tpu.memory_space<vmem>>, vector<1x1x128xf32>,
    %117 = vector.extract_strided_slice %76 {offsets = [10, 0], sizes = [1, 128], strides = [1, 1]} : vector<14x128xf32> to vector<1x128xf32>
    %118 = vector.shape_cast %117 : vector<1x128xf32> to vector<128xf32>
    %119 = vector.extract_strided_slice %76 {offsets = [11, 0], sizes = [1, 128], strides = [1, 1]} : vector<14x128xf32> to vector<1x128xf32>
    %120 = vector.shape_cast %119 : vector<1x128xf32> to vector<128xf32>
    %121 = arith.maximumf %118, %120 : vector<128xf32>
    %c0_43 = arith.constant 0 : index
    %c12 = arith.constant 12 : index
    %c0_44 = arith.constant 0 : index
    %122 = vector.load %arg5[%c0_43, %c12, %c0_44] : memref<1x49x128xf32, #tpu.memory_space<vmem>>, vector<1x1x128xf32>
    %123 = vector.shape_cast %122 : vector<1x1x128xf32> to vector<128xf32>
    %124 = vector.shape_cast %121 : vector<128xf32> to vector<1x1x128xf32>
    tpu.vector_store %arg5[%c0_43, %c12, %c0_44], %124 {strides = array<i32>} : memref<1x49x128xf32, #tpu.memory_space<vmem>>, vector<1x1x128xf32>,
    %125 = vector.extract_strided_slice %76 {offsets = [12, 0], sizes = [1, 128], strides = [1, 1]} : vector<14x128xf32> to vector<1x128xf32>
    %126 = vector.shape_cast %125 : vector<1x128xf32> to vector<128xf32>
    %127 = vector.extract_strided_slice %76 {offsets = [13, 0], sizes = [1, 128], strides = [1, 1]} : vector<14x128xf32> to vector<1x128xf32>
    %128 = vector.shape_cast %127 : vector<1x128xf32> to vector<128xf32>
    %129 = arith.maximumf %126, %128 : vector<128xf32>
    %c0_45 = arith.constant 0 : index
    %c13 = arith.constant 13 : index
    %c0_46 = arith.constant 0 : index
    %130 = vector.load %arg5[%c0_45, %c13, %c0_46] : memref<1x49x128xf32, #tpu.memory_space<vmem>>, vector<1x1x128xf32>
    %131 = vector.shape_cast %130 : vector<1x1x128xf32> to vector<128xf32>
    %132 = vector.shape_cast %129 : vector<128xf32> to vector<1x1x128xf32>
    tpu.vector_store %arg5[%c0_45, %c13, %c0_46], %132 {strides = array<i32>} : memref<1x49x128xf32, #tpu.memory_space<vmem>>, vector<1x1x128xf32>,
    %c0_47 = arith.constant 0 : index
    %c56 = arith.constant 56 : index
    %c0_48 = arith.constant 0 : index
    %133 = vector.load %arg1[%c0_47, %c56, %c0_48] : memref<1x196x128xf32, #tpu.memory_space<vmem>>, vector<1x14x128xf32>
    %134 = vector.shape_cast %133 : vector<1x14x128xf32> to vector<14x128xf32>
    %c0_49 = arith.constant 0 : index
    %c70 = arith.constant 70 : index
    %c0_50 = arith.constant 0 : index
    %135 = vector.load %arg1[%c0_49, %c70, %c0_50] : memref<1x196x128xf32, #tpu.memory_space<vmem>>, vector<1x14x128xf32>
    %136 = vector.shape_cast %135 : vector<1x14x128xf32> to vector<14x128xf32>
    %137 = arith.maximumf %134, %136 : vector<14x128xf32>
    %138 = vector.extract_strided_slice %137 {offsets = [0, 0], sizes = [1, 128], strides = [1, 1]} : vector<14x128xf32> to vector<1x128xf32>
    %139 = vector.shape_cast %138 : vector<1x128xf32> to vector<128xf32>
    %140 = vector.extract_strided_slice %137 {offsets = [1, 0], sizes = [1, 128], strides = [1, 1]} : vector<14x128xf32> to vector<1x128xf32>
    %141 = vector.shape_cast %140 : vector<1x128xf32> to vector<128xf32>
    %142 = arith.maximumf %139, %141 : vector<128xf32>
    %c0_51 = arith.constant 0 : index
    %c14_52 = arith.constant 14 : index
    %c0_53 = arith.constant 0 : index
    %143 = vector.load %arg5[%c0_51, %c14_52, %c0_53] : memref<1x49x128xf32, #tpu.memory_space<vmem>>, vector<1x1x128xf32>
    %144 = vector.shape_cast %143 : vector<1x1x128xf32> to vector<128xf32>
    %145 = vector.shape_cast %142 : vector<128xf32> to vector<1x1x128xf32>
    tpu.vector_store %arg5[%c0_51, %c14_52, %c0_53], %145 {strides = array<i32>} : memref<1x49x128xf32, #tpu.memory_space<vmem>>, vector<1x1x128xf32>,
    %146 = vector.extract_strided_slice %137 {offsets = [2, 0], sizes = [1, 128], strides = [1, 1]} : vector<14x128xf32> to vector<1x128xf32>
    %147 = vector.shape_cast %146 : vector<1x128xf32> to vector<128xf32>
    %148 = vector.extract_strided_slice %137 {offsets = [3, 0], sizes = [1, 128], strides = [1, 1]} : vector<14x128xf32> to vector<1x128xf32>
    %149 = vector.shape_cast %148 : vector<1x128xf32> to vector<128xf32>
    %150 = arith.maximumf %147, %149 : vector<128xf32>
    %c0_54 = arith.constant 0 : index
    %c15 = arith.constant 15 : index
    %c0_55 = arith.constant 0 : index
    %151 = vector.load %arg5[%c0_54, %c15, %c0_55] : memref<1x49x128xf32, #tpu.memory_space<vmem>>, vector<1x1x128xf32>
    %152 = vector.shape_cast %151 : vector<1x1x128xf32> to vector<128xf32>
    %153 = vector.shape_cast %150 : vector<128xf32> to vector<1x1x128xf32>
    tpu.vector_store %arg5[%c0_54, %c15, %c0_55], %153 {strides = array<i32>} : memref<1x49x128xf32, #tpu.memory_space<vmem>>, vector<1x1x128xf32>,
    %154 = vector.extract_strided_slice %137 {offsets = [4, 0], sizes = [1, 128], strides = [1, 1]} : vector<14x128xf32> to vector<1x128xf32>
    %155 = vector.shape_cast %154 : vector<1x128xf32> to vector<128xf32>
    %156 = vector.extract_strided_slice %137 {offsets = [5, 0], sizes = [1, 128], strides = [1, 1]} : vector<14x128xf32> to vector<1x128xf32>
    %157 = vector.shape_cast %156 : vector<1x128xf32> to vector<128xf32>
    %158 = arith.maximumf %155, %157 : vector<128xf32>
    %c0_56 = arith.constant 0 : index
    %c16 = arith.constant 16 : index
    %c0_57 = arith.constant 0 : index
    %159 = vector.load %arg5[%c0_56, %c16, %c0_57] : memref<1x49x128xf32, #tpu.memory_space<vmem>>, vector<1x1x128xf32>
    %160 = vector.shape_cast %159 : vector<1x1x128xf32> to vector<128xf32>
    %161 = vector.shape_cast %158 : vector<128xf32> to vector<1x1x128xf32>
    tpu.vector_store %arg5[%c0_56, %c16, %c0_57], %161 {strides = array<i32>} : memref<1x49x128xf32, #tpu.memory_space<vmem>>, vector<1x1x128xf32>,
    %162 = vector.extract_strided_slice %137 {offsets = [6, 0], sizes = [1, 128], strides = [1, 1]} : vector<14x128xf32> to vector<1x128xf32>
    %163 = vector.shape_cast %162 : vector<1x128xf32> to vector<128xf32>
    %164 = vector.extract_strided_slice %137 {offsets = [7, 0], sizes = [1, 128], strides = [1, 1]} : vector<14x128xf32> to vector<1x128xf32>
    %165 = vector.shape_cast %164 : vector<1x128xf32> to vector<128xf32>
    %166 = arith.maximumf %163, %165 : vector<128xf32>
    %c0_58 = arith.constant 0 : index
    %c17 = arith.constant 17 : index
    %c0_59 = arith.constant 0 : index
    %167 = vector.load %arg5[%c0_58, %c17, %c0_59] : memref<1x49x128xf32, #tpu.memory_space<vmem>>, vector<1x1x128xf32>
    %168 = vector.shape_cast %167 : vector<1x1x128xf32> to vector<128xf32>
    %169 = vector.shape_cast %166 : vector<128xf32> to vector<1x1x128xf32>
    tpu.vector_store %arg5[%c0_58, %c17, %c0_59], %169 {strides = array<i32>} : memref<1x49x128xf32, #tpu.memory_space<vmem>>, vector<1x1x128xf32>,
    %170 = vector.extract_strided_slice %137 {offsets = [8, 0], sizes = [1, 128], strides = [1, 1]} : vector<14x128xf32> to vector<1x128xf32>
    %171 = vector.shape_cast %170 : vector<1x128xf32> to vector<128xf32>
    %172 = vector.extract_strided_slice %137 {offsets = [9, 0], sizes = [1, 128], strides = [1, 1]} : vector<14x128xf32> to vector<1x128xf32>
    %173 = vector.shape_cast %172 : vector<1x128xf32> to vector<128xf32>
    %174 = arith.maximumf %171, %173 : vector<128xf32>
    %c0_60 = arith.constant 0 : index
    %c18 = arith.constant 18 : index
    %c0_61 = arith.constant 0 : index
    %175 = vector.load %arg5[%c0_60, %c18, %c0_61] : memref<1x49x128xf32, #tpu.memory_space<vmem>>, vector<1x1x128xf32>
    %176 = vector.shape_cast %175 : vector<1x1x128xf32> to vector<128xf32>
    %177 = vector.shape_cast %174 : vector<128xf32> to vector<1x1x128xf32>
    tpu.vector_store %arg5[%c0_60, %c18, %c0_61], %177 {strides = array<i32>} : memref<1x49x128xf32, #tpu.memory_space<vmem>>, vector<1x1x128xf32>,
    %178 = vector.extract_strided_slice %137 {offsets = [10, 0], sizes = [1, 128], strides = [1, 1]} : vector<14x128xf32> to vector<1x128xf32>
    %179 = vector.shape_cast %178 : vector<1x128xf32> to vector<128xf32>
    %180 = vector.extract_strided_slice %137 {offsets = [11, 0], sizes = [1, 128], strides = [1, 1]} : vector<14x128xf32> to vector<1x128xf32>
    %181 = vector.shape_cast %180 : vector<1x128xf32> to vector<128xf32>
    %182 = arith.maximumf %179, %181 : vector<128xf32>
    %c0_62 = arith.constant 0 : index
    %c19 = arith.constant 19 : index
    %c0_63 = arith.constant 0 : index
    %183 = vector.load %arg5[%c0_62, %c19, %c0_63] : memref<1x49x128xf32, #tpu.memory_space<vmem>>, vector<1x1x128xf32>
    %184 = vector.shape_cast %183 : vector<1x1x128xf32> to vector<128xf32>
    %185 = vector.shape_cast %182 : vector<128xf32> to vector<1x1x128xf32>
    tpu.vector_store %arg5[%c0_62, %c19, %c0_63], %185 {strides = array<i32>} : memref<1x49x128xf32, #tpu.memory_space<vmem>>, vector<1x1x128xf32>,
    %186 = vector.extract_strided_slice %137 {offsets = [12, 0], sizes = [1, 128], strides = [1, 1]} : vector<14x128xf32> to vector<1x128xf32>
    %187 = vector.shape_cast %186 : vector<1x128xf32> to vector<128xf32>
    %188 = vector.extract_strided_slice %137 {offsets = [13, 0], sizes = [1, 128], strides = [1, 1]} : vector<14x128xf32> to vector<1x128xf32>
    %189 = vector.shape_cast %188 : vector<1x128xf32> to vector<128xf32>
    %190 = arith.maximumf %187, %189 : vector<128xf32>
    %c0_64 = arith.constant 0 : index
    %c20 = arith.constant 20 : index
    %c0_65 = arith.constant 0 : index
    %191 = vector.load %arg5[%c0_64, %c20, %c0_65] : memref<1x49x128xf32, #tpu.memory_space<vmem>>, vector<1x1x128xf32>
    %192 = vector.shape_cast %191 : vector<1x1x128xf32> to vector<128xf32>
    %193 = vector.shape_cast %190 : vector<128xf32> to vector<1x1x128xf32>
    tpu.vector_store %arg5[%c0_64, %c20, %c0_65], %193 {strides = array<i32>} : memref<1x49x128xf32, #tpu.memory_space<vmem>>, vector<1x1x128xf32>,
    %c0_66 = arith.constant 0 : index
    %c84 = arith.constant 84 : index
    %c0_67 = arith.constant 0 : index
    %194 = vector.load %arg1[%c0_66, %c84, %c0_67] : memref<1x196x128xf32, #tpu.memory_space<vmem>>, vector<1x14x128xf32>
    %195 = vector.shape_cast %194 : vector<1x14x128xf32> to vector<14x128xf32>
    %c0_68 = arith.constant 0 : index
    %c98 = arith.constant 98 : index
    %c0_69 = arith.constant 0 : index
    %196 = vector.load %arg1[%c0_68, %c98, %c0_69] : memref<1x196x128xf32, #tpu.memory_space<vmem>>, vector<1x14x128xf32>
    %197 = vector.shape_cast %196 : vector<1x14x128xf32> to vector<14x128xf32>
    %198 = arith.maximumf %195, %197 : vector<14x128xf32>
    %199 = vector.extract_strided_slice %198 {offsets = [0, 0], sizes = [1, 128], strides = [1, 1]} : vector<14x128xf32> to vector<1x128xf32>
    %200 = vector.shape_cast %199 : vector<1x128xf32> to vector<128xf32>
    %201 = vector.extract_strided_slice %198 {offsets = [1, 0], sizes = [1, 128], strides = [1, 1]} : vector<14x128xf32> to vector<1x128xf32>
    %202 = vector.shape_cast %201 : vector<1x128xf32> to vector<128xf32>
    %203 = arith.maximumf %200, %202 : vector<128xf32>
    %c0_70 = arith.constant 0 : index
    %c21 = arith.constant 21 : index
    %c0_71 = arith.constant 0 : index
    %204 = vector.load %arg5[%c0_70, %c21, %c0_71] : memref<1x49x128xf32, #tpu.memory_space<vmem>>, vector<1x1x128xf32>
    %205 = vector.shape_cast %204 : vector<1x1x128xf32> to vector<128xf32>
    %206 = vector.shape_cast %203 : vector<128xf32> to vector<1x1x128xf32>
    tpu.vector_store %arg5[%c0_70, %c21, %c0_71], %206 {strides = array<i32>} : memref<1x49x128xf32, #tpu.memory_space<vmem>>, vector<1x1x128xf32>,
    %207 = vector.extract_strided_slice %198 {offsets = [2, 0], sizes = [1, 128], strides = [1, 1]} : vector<14x128xf32> to vector<1x128xf32>
    %208 = vector.shape_cast %207 : vector<1x128xf32> to vector<128xf32>
    %209 = vector.extract_strided_slice %198 {offsets = [3, 0], sizes = [1, 128], strides = [1, 1]} : vector<14x128xf32> to vector<1x128xf32>
    %210 = vector.shape_cast %209 : vector<1x128xf32> to vector<128xf32>
    %211 = arith.maximumf %208, %210 : vector<128xf32>
    %c0_72 = arith.constant 0 : index
    %c22 = arith.constant 22 : index
    %c0_73 = arith.constant 0 : index
    %212 = vector.load %arg5[%c0_72, %c22, %c0_73] : memref<1x49x128xf32, #tpu.memory_space<vmem>>, vector<1x1x128xf32>
    %213 = vector.shape_cast %212 : vector<1x1x128xf32> to vector<128xf32>
    %214 = vector.shape_cast %211 : vector<128xf32> to vector<1x1x128xf32>
    tpu.vector_store %arg5[%c0_72, %c22, %c0_73], %214 {strides = array<i32>} : memref<1x49x128xf32, #tpu.memory_space<vmem>>, vector<1x1x128xf32>,
    %215 = vector.extract_strided_slice %198 {offsets = [4, 0], sizes = [1, 128], strides = [1, 1]} : vector<14x128xf32> to vector<1x128xf32>
    %216 = vector.shape_cast %215 : vector<1x128xf32> to vector<128xf32>
    %217 = vector.extract_strided_slice %198 {offsets = [5, 0], sizes = [1, 128], strides = [1, 1]} : vector<14x128xf32> to vector<1x128xf32>
    %218 = vector.shape_cast %217 : vector<1x128xf32> to vector<128xf32>
    %219 = arith.maximumf %216, %218 : vector<128xf32>
    %c0_74 = arith.constant 0 : index
    %c23 = arith.constant 23 : index
    %c0_75 = arith.constant 0 : index
    %220 = vector.load %arg5[%c0_74, %c23, %c0_75] : memref<1x49x128xf32, #tpu.memory_space<vmem>>, vector<1x1x128xf32>
    %221 = vector.shape_cast %220 : vector<1x1x128xf32> to vector<128xf32>
    %222 = vector.shape_cast %219 : vector<128xf32> to vector<1x1x128xf32>
    tpu.vector_store %arg5[%c0_74, %c23, %c0_75], %222 {strides = array<i32>} : memref<1x49x128xf32, #tpu.memory_space<vmem>>, vector<1x1x128xf32>,
    %223 = vector.extract_strided_slice %198 {offsets = [6, 0], sizes = [1, 128], strides = [1, 1]} : vector<14x128xf32> to vector<1x128xf32>
    %224 = vector.shape_cast %223 : vector<1x128xf32> to vector<128xf32>
    %225 = vector.extract_strided_slice %198 {offsets = [7, 0], sizes = [1, 128], strides = [1, 1]} : vector<14x128xf32> to vector<1x128xf32>
    %226 = vector.shape_cast %225 : vector<1x128xf32> to vector<128xf32>
    %227 = arith.maximumf %224, %226 : vector<128xf32>
    %c0_76 = arith.constant 0 : index
    %c24 = arith.constant 24 : index
    %c0_77 = arith.constant 0 : index
    %228 = vector.load %arg5[%c0_76, %c24, %c0_77] : memref<1x49x128xf32, #tpu.memory_space<vmem>>, vector<1x1x128xf32>
    %229 = vector.shape_cast %228 : vector<1x1x128xf32> to vector<128xf32>
    %230 = vector.shape_cast %227 : vector<128xf32> to vector<1x1x128xf32>
    tpu.vector_store %arg5[%c0_76, %c24, %c0_77], %230 {strides = array<i32>} : memref<1x49x128xf32, #tpu.memory_space<vmem>>, vector<1x1x128xf32>,
    %231 = vector.extract_strided_slice %198 {offsets = [8, 0], sizes = [1, 128], strides = [1, 1]} : vector<14x128xf32> to vector<1x128xf32>
    %232 = vector.shape_cast %231 : vector<1x128xf32> to vector<128xf32>
    %233 = vector.extract_strided_slice %198 {offsets = [9, 0], sizes = [1, 128], strides = [1, 1]} : vector<14x128xf32> to vector<1x128xf32>
    %234 = vector.shape_cast %233 : vector<1x128xf32> to vector<128xf32>
    %235 = arith.maximumf %232, %234 : vector<128xf32>
    %c0_78 = arith.constant 0 : index
    %c25 = arith.constant 25 : index
    %c0_79 = arith.constant 0 : index
    %236 = vector.load %arg5[%c0_78, %c25, %c0_79] : memref<1x49x128xf32, #tpu.memory_space<vmem>>, vector<1x1x128xf32>
    %237 = vector.shape_cast %236 : vector<1x1x128xf32> to vector<128xf32>
    %238 = vector.shape_cast %235 : vector<128xf32> to vector<1x1x128xf32>
    tpu.vector_store %arg5[%c0_78, %c25, %c0_79], %238 {strides = array<i32>} : memref<1x49x128xf32, #tpu.memory_space<vmem>>, vector<1x1x128xf32>,
    %239 = vector.extract_strided_slice %198 {offsets = [10, 0], sizes = [1, 128], strides = [1, 1]} : vector<14x128xf32> to vector<1x128xf32>
    %240 = vector.shape_cast %239 : vector<1x128xf32> to vector<128xf32>
    %241 = vector.extract_strided_slice %198 {offsets = [11, 0], sizes = [1, 128], strides = [1, 1]} : vector<14x128xf32> to vector<1x128xf32>
    %242 = vector.shape_cast %241 : vector<1x128xf32> to vector<128xf32>
    %243 = arith.maximumf %240, %242 : vector<128xf32>
    %c0_80 = arith.constant 0 : index
    %c26 = arith.constant 26 : index
    %c0_81 = arith.constant 0 : index
    %244 = vector.load %arg5[%c0_80, %c26, %c0_81] : memref<1x49x128xf32, #tpu.memory_space<vmem>>, vector<1x1x128xf32>
    %245 = vector.shape_cast %244 : vector<1x1x128xf32> to vector<128xf32>
    %246 = vector.shape_cast %243 : vector<128xf32> to vector<1x1x128xf32>
    tpu.vector_store %arg5[%c0_80, %c26, %c0_81], %246 {strides = array<i32>} : memref<1x49x128xf32, #tpu.memory_space<vmem>>, vector<1x1x128xf32>,
    %247 = vector.extract_strided_slice %198 {offsets = [12, 0], sizes = [1, 128], strides = [1, 1]} : vector<14x128xf32> to vector<1x128xf32>
    %248 = vector.shape_cast %247 : vector<1x128xf32> to vector<128xf32>
    %249 = vector.extract_strided_slice %198 {offsets = [13, 0], sizes = [1, 128], strides = [1, 1]} : vector<14x128xf32> to vector<1x128xf32>
    %250 = vector.shape_cast %249 : vector<1x128xf32> to vector<128xf32>
    %251 = arith.maximumf %248, %250 : vector<128xf32>
    %c0_82 = arith.constant 0 : index
    %c27 = arith.constant 27 : index
    %c0_83 = arith.constant 0 : index
    %252 = vector.load %arg5[%c0_82, %c27, %c0_83] : memref<1x49x128xf32, #tpu.memory_space<vmem>>, vector<1x1x128xf32>
    %253 = vector.shape_cast %252 : vector<1x1x128xf32> to vector<128xf32>
    %254 = vector.shape_cast %251 : vector<128xf32> to vector<1x1x128xf32>
    tpu.vector_store %arg5[%c0_82, %c27, %c0_83], %254 {strides = array<i32>} : memref<1x49x128xf32, #tpu.memory_space<vmem>>, vector<1x1x128xf32>,
    %c0_84 = arith.constant 0 : index
    %c112 = arith.constant 112 : index
    %c0_85 = arith.constant 0 : index
    %255 = vector.load %arg1[%c0_84, %c112, %c0_85] : memref<1x196x128xf32, #tpu.memory_space<vmem>>, vector<1x14x128xf32>
    %256 = vector.shape_cast %255 : vector<1x14x128xf32> to vector<14x128xf32>
    %c0_86 = arith.constant 0 : index
    %c126 = arith.constant 126 : index
    %c0_87 = arith.constant 0 : index
    %257 = vector.load %arg1[%c0_86, %c126, %c0_87] : memref<1x196x128xf32, #tpu.memory_space<vmem>>, vector<1x14x128xf32>
    %258 = vector.shape_cast %257 : vector<1x14x128xf32> to vector<14x128xf32>
    %259 = arith.maximumf %256, %258 : vector<14x128xf32>
    %260 = vector.extract_strided_slice %259 {offsets = [0, 0], sizes = [1, 128], strides = [1, 1]} : vector<14x128xf32> to vector<1x128xf32>
    %261 = vector.shape_cast %260 : vector<1x128xf32> to vector<128xf32>
    %262 = vector.extract_strided_slice %259 {offsets = [1, 0], sizes = [1, 128], strides = [1, 1]} : vector<14x128xf32> to vector<1x128xf32>
    %263 = vector.shape_cast %262 : vector<1x128xf32> to vector<128xf32>
    %264 = arith.maximumf %261, %263 : vector<128xf32>
    %c0_88 = arith.constant 0 : index
    %c28_89 = arith.constant 28 : index
    %c0_90 = arith.constant 0 : index
    %265 = vector.load %arg5[%c0_88, %c28_89, %c0_90] : memref<1x49x128xf32, #tpu.memory_space<vmem>>, vector<1x1x128xf32>
    %266 = vector.shape_cast %265 : vector<1x1x128xf32> to vector<128xf32>
    %267 = vector.shape_cast %264 : vector<128xf32> to vector<1x1x128xf32>
    tpu.vector_store %arg5[%c0_88, %c28_89, %c0_90], %267 {strides = array<i32>} : memref<1x49x128xf32, #tpu.memory_space<vmem>>, vector<1x1x128xf32>,
    %268 = vector.extract_strided_slice %259 {offsets = [2, 0], sizes = [1, 128], strides = [1, 1]} : vector<14x128xf32> to vector<1x128xf32>
    %269 = vector.shape_cast %268 : vector<1x128xf32> to vector<128xf32>
    %270 = vector.extract_strided_slice %259 {offsets = [3, 0], sizes = [1, 128], strides = [1, 1]} : vector<14x128xf32> to vector<1x128xf32>
    %271 = vector.shape_cast %270 : vector<1x128xf32> to vector<128xf32>
    %272 = arith.maximumf %269, %271 : vector<128xf32>
    %c0_91 = arith.constant 0 : index
    %c29 = arith.constant 29 : index
    %c0_92 = arith.constant 0 : index
    %273 = vector.load %arg5[%c0_91, %c29, %c0_92] : memref<1x49x128xf32, #tpu.memory_space<vmem>>, vector<1x1x128xf32>
    %274 = vector.shape_cast %273 : vector<1x1x128xf32> to vector<128xf32>
    %275 = vector.shape_cast %272 : vector<128xf32> to vector<1x1x128xf32>
    tpu.vector_store %arg5[%c0_91, %c29, %c0_92], %275 {strides = array<i32>} : memref<1x49x128xf32, #tpu.memory_space<vmem>>, vector<1x1x128xf32>,
    %276 = vector.extract_strided_slice %259 {offsets = [4, 0], sizes = [1, 128], strides = [1, 1]} : vector<14x128xf32> to vector<1x128xf32>
    %277 = vector.shape_cast %276 : vector<1x128xf32> to vector<128xf32>
    %278 = vector.extract_strided_slice %259 {offsets = [5, 0], sizes = [1, 128], strides = [1, 1]} : vector<14x128xf32> to vector<1x128xf32>
    %279 = vector.shape_cast %278 : vector<1x128xf32> to vector<128xf32>
    %280 = arith.maximumf %277, %279 : vector<128xf32>
    %c0_93 = arith.constant 0 : index
    %c30 = arith.constant 30 : index
    %c0_94 = arith.constant 0 : index
    %281 = vector.load %arg5[%c0_93, %c30, %c0_94] : memref<1x49x128xf32, #tpu.memory_space<vmem>>, vector<1x1x128xf32>
    %282 = vector.shape_cast %281 : vector<1x1x128xf32> to vector<128xf32>
    %283 = vector.shape_cast %280 : vector<128xf32> to vector<1x1x128xf32>
    tpu.vector_store %arg5[%c0_93, %c30, %c0_94], %283 {strides = array<i32>} : memref<1x49x128xf32, #tpu.memory_space<vmem>>, vector<1x1x128xf32>,
    %284 = vector.extract_strided_slice %259 {offsets = [6, 0], sizes = [1, 128], strides = [1, 1]} : vector<14x128xf32> to vector<1x128xf32>
    %285 = vector.shape_cast %284 : vector<1x128xf32> to vector<128xf32>
    %286 = vector.extract_strided_slice %259 {offsets = [7, 0], sizes = [1, 128], strides = [1, 1]} : vector<14x128xf32> to vector<1x128xf32>
    %287 = vector.shape_cast %286 : vector<1x128xf32> to vector<128xf32>
    %288 = arith.maximumf %285, %287 : vector<128xf32>
    %c0_95 = arith.constant 0 : index
    %c31 = arith.constant 31 : index
    %c0_96 = arith.constant 0 : index
    %289 = vector.load %arg5[%c0_95, %c31, %c0_96] : memref<1x49x128xf32, #tpu.memory_space<vmem>>, vector<1x1x128xf32>
    %290 = vector.shape_cast %289 : vector<1x1x128xf32> to vector<128xf32>
    %291 = vector.shape_cast %288 : vector<128xf32> to vector<1x1x128xf32>
    tpu.vector_store %arg5[%c0_95, %c31, %c0_96], %291 {strides = array<i32>} : memref<1x49x128xf32, #tpu.memory_space<vmem>>, vector<1x1x128xf32>,
    %292 = vector.extract_strided_slice %259 {offsets = [8, 0], sizes = [1, 128], strides = [1, 1]} : vector<14x128xf32> to vector<1x128xf32>
    %293 = vector.shape_cast %292 : vector<1x128xf32> to vector<128xf32>
    %294 = vector.extract_strided_slice %259 {offsets = [9, 0], sizes = [1, 128], strides = [1, 1]} : vector<14x128xf32> to vector<1x128xf32>
    %295 = vector.shape_cast %294 : vector<1x128xf32> to vector<128xf32>
    %296 = arith.maximumf %293, %295 : vector<128xf32>
    %c0_97 = arith.constant 0 : index
    %c32 = arith.constant 32 : index
    %c0_98 = arith.constant 0 : index
    %297 = vector.load %arg5[%c0_97, %c32, %c0_98] : memref<1x49x128xf32, #tpu.memory_space<vmem>>, vector<1x1x128xf32>
    %298 = vector.shape_cast %297 : vector<1x1x128xf32> to vector<128xf32>
    %299 = vector.shape_cast %296 : vector<128xf32> to vector<1x1x128xf32>
    tpu.vector_store %arg5[%c0_97, %c32, %c0_98], %299 {strides = array<i32>} : memref<1x49x128xf32, #tpu.memory_space<vmem>>, vector<1x1x128xf32>,
    %300 = vector.extract_strided_slice %259 {offsets = [10, 0], sizes = [1, 128], strides = [1, 1]} : vector<14x128xf32> to vector<1x128xf32>
    %301 = vector.shape_cast %300 : vector<1x128xf32> to vector<128xf32>
    %302 = vector.extract_strided_slice %259 {offsets = [11, 0], sizes = [1, 128], strides = [1, 1]} : vector<14x128xf32> to vector<1x128xf32>
    %303 = vector.shape_cast %302 : vector<1x128xf32> to vector<128xf32>
    %304 = arith.maximumf %301, %303 : vector<128xf32>
    %c0_99 = arith.constant 0 : index
    %c33 = arith.constant 33 : index
    %c0_100 = arith.constant 0 : index
    %305 = vector.load %arg5[%c0_99, %c33, %c0_100] : memref<1x49x128xf32, #tpu.memory_space<vmem>>, vector<1x1x128xf32>
    %306 = vector.shape_cast %305 : vector<1x1x128xf32> to vector<128xf32>
    %307 = vector.shape_cast %304 : vector<128xf32> to vector<1x1x128xf32>
    tpu.vector_store %arg5[%c0_99, %c33, %c0_100], %307 {strides = array<i32>} : memref<1x49x128xf32, #tpu.memory_space<vmem>>, vector<1x1x128xf32>,
    %308 = vector.extract_strided_slice %259 {offsets = [12, 0], sizes = [1, 128], strides = [1, 1]} : vector<14x128xf32> to vector<1x128xf32>
    %309 = vector.shape_cast %308 : vector<1x128xf32> to vector<128xf32>
    %310 = vector.extract_strided_slice %259 {offsets = [13, 0], sizes = [1, 128], strides = [1, 1]} : vector<14x128xf32> to vector<1x128xf32>
    %311 = vector.shape_cast %310 : vector<1x128xf32> to vector<128xf32>
    %312 = arith.maximumf %309, %311 : vector<128xf32>
    %c0_101 = arith.constant 0 : index
    %c34 = arith.constant 34 : index
    %c0_102 = arith.constant 0 : index
    %313 = vector.load %arg5[%c0_101, %c34, %c0_102] : memref<1x49x128xf32, #tpu.memory_space<vmem>>, vector<1x1x128xf32>
    %314 = vector.shape_cast %313 : vector<1x1x128xf32> to vector<128xf32>
    %315 = vector.shape_cast %312 : vector<128xf32> to vector<1x1x128xf32>
    tpu.vector_store %arg5[%c0_101, %c34, %c0_102], %315 {strides = array<i32>} : memref<1x49x128xf32, #tpu.memory_space<vmem>>, vector<1x1x128xf32>,
    %c0_103 = arith.constant 0 : index
    %c140 = arith.constant 140 : index
    %c0_104 = arith.constant 0 : index
    %316 = vector.load %arg1[%c0_103, %c140, %c0_104] : memref<1x196x128xf32, #tpu.memory_space<vmem>>, vector<1x14x128xf32>
    %317 = vector.shape_cast %316 : vector<1x14x128xf32> to vector<14x128xf32>
    %c0_105 = arith.constant 0 : index
    %c154 = arith.constant 154 : index
    %c0_106 = arith.constant 0 : index
    %318 = vector.load %arg1[%c0_105, %c154, %c0_106] : memref<1x196x128xf32, #tpu.memory_space<vmem>>, vector<1x14x128xf32>
    %319 = vector.shape_cast %318 : vector<1x14x128xf32> to vector<14x128xf32>
    %320 = arith.maximumf %317, %319 : vector<14x128xf32>
    %321 = vector.extract_strided_slice %320 {offsets = [0, 0], sizes = [1, 128], strides = [1, 1]} : vector<14x128xf32> to vector<1x128xf32>
    %322 = vector.shape_cast %321 : vector<1x128xf32> to vector<128xf32>
    %323 = vector.extract_strided_slice %320 {offsets = [1, 0], sizes = [1, 128], strides = [1, 1]} : vector<14x128xf32> to vector<1x128xf32>
    %324 = vector.shape_cast %323 : vector<1x128xf32> to vector<128xf32>
    %325 = arith.maximumf %322, %324 : vector<128xf32>
    %c0_107 = arith.constant 0 : index
    %c35 = arith.constant 35 : index
    %c0_108 = arith.constant 0 : index
    %326 = vector.load %arg5[%c0_107, %c35, %c0_108] : memref<1x49x128xf32, #tpu.memory_space<vmem>>, vector<1x1x128xf32>
    %327 = vector.shape_cast %326 : vector<1x1x128xf32> to vector<128xf32>
    %328 = vector.shape_cast %325 : vector<128xf32> to vector<1x1x128xf32>
    tpu.vector_store %arg5[%c0_107, %c35, %c0_108], %328 {strides = array<i32>} : memref<1x49x128xf32, #tpu.memory_space<vmem>>, vector<1x1x128xf32>,
    %329 = vector.extract_strided_slice %320 {offsets = [2, 0], sizes = [1, 128], strides = [1, 1]} : vector<14x128xf32> to vector<1x128xf32>
    %330 = vector.shape_cast %329 : vector<1x128xf32> to vector<128xf32>
    %331 = vector.extract_strided_slice %320 {offsets = [3, 0], sizes = [1, 128], strides = [1, 1]} : vector<14x128xf32> to vector<1x128xf32>
    %332 = vector.shape_cast %331 : vector<1x128xf32> to vector<128xf32>
    %333 = arith.maximumf %330, %332 : vector<128xf32>
    %c0_109 = arith.constant 0 : index
    %c36 = arith.constant 36 : index
    %c0_110 = arith.constant 0 : index
    %334 = vector.load %arg5[%c0_109, %c36, %c0_110] : memref<1x49x128xf32, #tpu.memory_space<vmem>>, vector<1x1x128xf32>
    %335 = vector.shape_cast %334 : vector<1x1x128xf32> to vector<128xf32>
    %336 = vector.shape_cast %333 : vector<128xf32> to vector<1x1x128xf32>
    tpu.vector_store %arg5[%c0_109, %c36, %c0_110], %336 {strides = array<i32>} : memref<1x49x128xf32, #tpu.memory_space<vmem>>, vector<1x1x128xf32>,
    %337 = vector.extract_strided_slice %320 {offsets = [4, 0], sizes = [1, 128], strides = [1, 1]} : vector<14x128xf32> to vector<1x128xf32>
    %338 = vector.shape_cast %337 : vector<1x128xf32> to vector<128xf32>
    %339 = vector.extract_strided_slice %320 {offsets = [5, 0], sizes = [1, 128], strides = [1, 1]} : vector<14x128xf32> to vector<1x128xf32>
    %340 = vector.shape_cast %339 : vector<1x128xf32> to vector<128xf32>
    %341 = arith.maximumf %338, %340 : vector<128xf32>
    %c0_111 = arith.constant 0 : index
    %c37 = arith.constant 37 : index
    %c0_112 = arith.constant 0 : index
    %342 = vector.load %arg5[%c0_111, %c37, %c0_112] : memref<1x49x128xf32, #tpu.memory_space<vmem>>, vector<1x1x128xf32>
    %343 = vector.shape_cast %342 : vector<1x1x128xf32> to vector<128xf32>
    %344 = vector.shape_cast %341 : vector<128xf32> to vector<1x1x128xf32>
    tpu.vector_store %arg5[%c0_111, %c37, %c0_112], %344 {strides = array<i32>} : memref<1x49x128xf32, #tpu.memory_space<vmem>>, vector<1x1x128xf32>,
    %345 = vector.extract_strided_slice %320 {offsets = [6, 0], sizes = [1, 128], strides = [1, 1]} : vector<14x128xf32> to vector<1x128xf32>
    %346 = vector.shape_cast %345 : vector<1x128xf32> to vector<128xf32>
    %347 = vector.extract_strided_slice %320 {offsets = [7, 0], sizes = [1, 128], strides = [1, 1]} : vector<14x128xf32> to vector<1x128xf32>
    %348 = vector.shape_cast %347 : vector<1x128xf32> to vector<128xf32>
    %349 = arith.maximumf %346, %348 : vector<128xf32>
    %c0_113 = arith.constant 0 : index
    %c38 = arith.constant 38 : index
    %c0_114 = arith.constant 0 : index
    %350 = vector.load %arg5[%c0_113, %c38, %c0_114] : memref<1x49x128xf32, #tpu.memory_space<vmem>>, vector<1x1x128xf32>
    %351 = vector.shape_cast %350 : vector<1x1x128xf32> to vector<128xf32>
    %352 = vector.shape_cast %349 : vector<128xf32> to vector<1x1x128xf32>
    tpu.vector_store %arg5[%c0_113, %c38, %c0_114], %352 {strides = array<i32>} : memref<1x49x128xf32, #tpu.memory_space<vmem>>, vector<1x1x128xf32>,
    %353 = vector.extract_strided_slice %320 {offsets = [8, 0], sizes = [1, 128], strides = [1, 1]} : vector<14x128xf32> to vector<1x128xf32>
    %354 = vector.shape_cast %353 : vector<1x128xf32> to vector<128xf32>
    %355 = vector.extract_strided_slice %320 {offsets = [9, 0], sizes = [1, 128], strides = [1, 1]} : vector<14x128xf32> to vector<1x128xf32>
    %356 = vector.shape_cast %355 : vector<1x128xf32> to vector<128xf32>
    %357 = arith.maximumf %354, %356 : vector<128xf32>
    %c0_115 = arith.constant 0 : index
    %c39 = arith.constant 39 : index
    %c0_116 = arith.constant 0 : index
    %358 = vector.load %arg5[%c0_115, %c39, %c0_116] : memref<1x49x128xf32, #tpu.memory_space<vmem>>, vector<1x1x128xf32>
    %359 = vector.shape_cast %358 : vector<1x1x128xf32> to vector<128xf32>
    %360 = vector.shape_cast %357 : vector<128xf32> to vector<1x1x128xf32>
    tpu.vector_store %arg5[%c0_115, %c39, %c0_116], %360 {strides = array<i32>} : memref<1x49x128xf32, #tpu.memory_space<vmem>>, vector<1x1x128xf32>,
    %361 = vector.extract_strided_slice %320 {offsets = [10, 0], sizes = [1, 128], strides = [1, 1]} : vector<14x128xf32> to vector<1x128xf32>
    %362 = vector.shape_cast %361 : vector<1x128xf32> to vector<128xf32>
    %363 = vector.extract_strided_slice %320 {offsets = [11, 0], sizes = [1, 128], strides = [1, 1]} : vector<14x128xf32> to vector<1x128xf32>
    %364 = vector.shape_cast %363 : vector<1x128xf32> to vector<128xf32>
    %365 = arith.maximumf %362, %364 : vector<128xf32>
    %c0_117 = arith.constant 0 : index
    %c40 = arith.constant 40 : index
    %c0_118 = arith.constant 0 : index
    %366 = vector.load %arg5[%c0_117, %c40, %c0_118] : memref<1x49x128xf32, #tpu.memory_space<vmem>>, vector<1x1x128xf32>
    %367 = vector.shape_cast %366 : vector<1x1x128xf32> to vector<128xf32>
    %368 = vector.shape_cast %365 : vector<128xf32> to vector<1x1x128xf32>
    tpu.vector_store %arg5[%c0_117, %c40, %c0_118], %368 {strides = array<i32>} : memref<1x49x128xf32, #tpu.memory_space<vmem>>, vector<1x1x128xf32>,
    %369 = vector.extract_strided_slice %320 {offsets = [12, 0], sizes = [1, 128], strides = [1, 1]} : vector<14x128xf32> to vector<1x128xf32>
    %370 = vector.shape_cast %369 : vector<1x128xf32> to vector<128xf32>
    %371 = vector.extract_strided_slice %320 {offsets = [13, 0], sizes = [1, 128], strides = [1, 1]} : vector<14x128xf32> to vector<1x128xf32>
    %372 = vector.shape_cast %371 : vector<1x128xf32> to vector<128xf32>
    %373 = arith.maximumf %370, %372 : vector<128xf32>
    %c0_119 = arith.constant 0 : index
    %c41 = arith.constant 41 : index
    %c0_120 = arith.constant 0 : index
    %374 = vector.load %arg5[%c0_119, %c41, %c0_120] : memref<1x49x128xf32, #tpu.memory_space<vmem>>, vector<1x1x128xf32>
    %375 = vector.shape_cast %374 : vector<1x1x128xf32> to vector<128xf32>
    %376 = vector.shape_cast %373 : vector<128xf32> to vector<1x1x128xf32>
    tpu.vector_store %arg5[%c0_119, %c41, %c0_120], %376 {strides = array<i32>} : memref<1x49x128xf32, #tpu.memory_space<vmem>>, vector<1x1x128xf32>,
    %c0_121 = arith.constant 0 : index
    %c168 = arith.constant 168 : index
    %c0_122 = arith.constant 0 : index
    %377 = vector.load %arg1[%c0_121, %c168, %c0_122] : memref<1x196x128xf32, #tpu.memory_space<vmem>>, vector<1x14x128xf32>
    %378 = vector.shape_cast %377 : vector<1x14x128xf32> to vector<14x128xf32>
    %c0_123 = arith.constant 0 : index
    %c182 = arith.constant 182 : index
    %c0_124 = arith.constant 0 : index
    %379 = vector.load %arg1[%c0_123, %c182, %c0_124] : memref<1x196x128xf32, #tpu.memory_space<vmem>>, vector<1x14x128xf32>
    %380 = vector.shape_cast %379 : vector<1x14x128xf32> to vector<14x128xf32>
    %381 = arith.maximumf %378, %380 : vector<14x128xf32>
    %382 = vector.extract_strided_slice %381 {offsets = [0, 0], sizes = [1, 128], strides = [1, 1]} : vector<14x128xf32> to vector<1x128xf32>
    %383 = vector.shape_cast %382 : vector<1x128xf32> to vector<128xf32>
    %384 = vector.extract_strided_slice %381 {offsets = [1, 0], sizes = [1, 128], strides = [1, 1]} : vector<14x128xf32> to vector<1x128xf32>
    %385 = vector.shape_cast %384 : vector<1x128xf32> to vector<128xf32>
    %386 = arith.maximumf %383, %385 : vector<128xf32>
    %c0_125 = arith.constant 0 : index
    %c42_126 = arith.constant 42 : index
    %c0_127 = arith.constant 0 : index
    %387 = vector.load %arg5[%c0_125, %c42_126, %c0_127] : memref<1x49x128xf32, #tpu.memory_space<vmem>>, vector<1x1x128xf32>
    %388 = vector.shape_cast %387 : vector<1x1x128xf32> to vector<128xf32>
    %389 = vector.shape_cast %386 : vector<128xf32> to vector<1x1x128xf32>
    tpu.vector_store %arg5[%c0_125, %c42_126, %c0_127], %389 {strides = array<i32>} : memref<1x49x128xf32, #tpu.memory_space<vmem>>, vector<1x1x128xf32>,
    %390 = vector.extract_strided_slice %381 {offsets = [2, 0], sizes = [1, 128], strides = [1, 1]} : vector<14x128xf32> to vector<1x128xf32>
    %391 = vector.shape_cast %390 : vector<1x128xf32> to vector<128xf32>
    %392 = vector.extract_strided_slice %381 {offsets = [3, 0], sizes = [1, 128], strides = [1, 1]} : vector<14x128xf32> to vector<1x128xf32>
    %393 = vector.shape_cast %392 : vector<1x128xf32> to vector<128xf32>
    %394 = arith.maximumf %391, %393 : vector<128xf32>
    %c0_128 = arith.constant 0 : index
    %c43 = arith.constant 43 : index
    %c0_129 = arith.constant 0 : index
    %395 = vector.load %arg5[%c0_128, %c43, %c0_129] : memref<1x49x128xf32, #tpu.memory_space<vmem>>, vector<1x1x128xf32>
    %396 = vector.shape_cast %395 : vector<1x1x128xf32> to vector<128xf32>
    %397 = vector.shape_cast %394 : vector<128xf32> to vector<1x1x128xf32>
    tpu.vector_store %arg5[%c0_128, %c43, %c0_129], %397 {strides = array<i32>} : memref<1x49x128xf32, #tpu.memory_space<vmem>>, vector<1x1x128xf32>,
    %398 = vector.extract_strided_slice %381 {offsets = [4, 0], sizes = [1, 128], strides = [1, 1]} : vector<14x128xf32> to vector<1x128xf32>
    %399 = vector.shape_cast %398 : vector<1x128xf32> to vector<128xf32>
    %400 = vector.extract_strided_slice %381 {offsets = [5, 0], sizes = [1, 128], strides = [1, 1]} : vector<14x128xf32> to vector<1x128xf32>
    %401 = vector.shape_cast %400 : vector<1x128xf32> to vector<128xf32>
    %402 = arith.maximumf %399, %401 : vector<128xf32>
    %c0_130 = arith.constant 0 : index
    %c44 = arith.constant 44 : index
    %c0_131 = arith.constant 0 : index
    %403 = vector.load %arg5[%c0_130, %c44, %c0_131] : memref<1x49x128xf32, #tpu.memory_space<vmem>>, vector<1x1x128xf32>
    %404 = vector.shape_cast %403 : vector<1x1x128xf32> to vector<128xf32>
    %405 = vector.shape_cast %402 : vector<128xf32> to vector<1x1x128xf32>
    tpu.vector_store %arg5[%c0_130, %c44, %c0_131], %405 {strides = array<i32>} : memref<1x49x128xf32, #tpu.memory_space<vmem>>, vector<1x1x128xf32>,
    %406 = vector.extract_strided_slice %381 {offsets = [6, 0], sizes = [1, 128], strides = [1, 1]} : vector<14x128xf32> to vector<1x128xf32>
    %407 = vector.shape_cast %406 : vector<1x128xf32> to vector<128xf32>
    %408 = vector.extract_strided_slice %381 {offsets = [7, 0], sizes = [1, 128], strides = [1, 1]} : vector<14x128xf32> to vector<1x128xf32>
    %409 = vector.shape_cast %408 : vector<1x128xf32> to vector<128xf32>
    %410 = arith.maximumf %407, %409 : vector<128xf32>
    %c0_132 = arith.constant 0 : index
    %c45 = arith.constant 45 : index
    %c0_133 = arith.constant 0 : index
    %411 = vector.load %arg5[%c0_132, %c45, %c0_133] : memref<1x49x128xf32, #tpu.memory_space<vmem>>, vector<1x1x128xf32>
    %412 = vector.shape_cast %411 : vector<1x1x128xf32> to vector<128xf32>
    %413 = vector.shape_cast %410 : vector<128xf32> to vector<1x1x128xf32>
    tpu.vector_store %arg5[%c0_132, %c45, %c0_133], %413 {strides = array<i32>} : memref<1x49x128xf32, #tpu.memory_space<vmem>>, vector<1x1x128xf32>,
    %414 = vector.extract_strided_slice %381 {offsets = [8, 0], sizes = [1, 128], strides = [1, 1]} : vector<14x128xf32> to vector<1x128xf32>
    %415 = vector.shape_cast %414 : vector<1x128xf32> to vector<128xf32>
    %416 = vector.extract_strided_slice %381 {offsets = [9, 0], sizes = [1, 128], strides = [1, 1]} : vector<14x128xf32> to vector<1x128xf32>
    %417 = vector.shape_cast %416 : vector<1x128xf32> to vector<128xf32>
    %418 = arith.maximumf %415, %417 : vector<128xf32>
    %c0_134 = arith.constant 0 : index
    %c46 = arith.constant 46 : index
    %c0_135 = arith.constant 0 : index
    %419 = vector.load %arg5[%c0_134, %c46, %c0_135] : memref<1x49x128xf32, #tpu.memory_space<vmem>>, vector<1x1x128xf32>
    %420 = vector.shape_cast %419 : vector<1x1x128xf32> to vector<128xf32>
    %421 = vector.shape_cast %418 : vector<128xf32> to vector<1x1x128xf32>
    tpu.vector_store %arg5[%c0_134, %c46, %c0_135], %421 {strides = array<i32>} : memref<1x49x128xf32, #tpu.memory_space<vmem>>, vector<1x1x128xf32>,
    %422 = vector.extract_strided_slice %381 {offsets = [10, 0], sizes = [1, 128], strides = [1, 1]} : vector<14x128xf32> to vector<1x128xf32>
    %423 = vector.shape_cast %422 : vector<1x128xf32> to vector<128xf32>
    %424 = vector.extract_strided_slice %381 {offsets = [11, 0], sizes = [1, 128], strides = [1, 1]} : vector<14x128xf32> to vector<1x128xf32>
    %425 = vector.shape_cast %424 : vector<1x128xf32> to vector<128xf32>
    %426 = arith.maximumf %423, %425 : vector<128xf32>
    %c0_136 = arith.constant 0 : index
    %c47 = arith.constant 47 : index
    %c0_137 = arith.constant 0 : index
    %427 = vector.load %arg5[%c0_136, %c47, %c0_137] : memref<1x49x128xf32, #tpu.memory_space<vmem>>, vector<1x1x128xf32>
    %428 = vector.shape_cast %427 : vector<1x1x128xf32> to vector<128xf32>
    %429 = vector.shape_cast %426 : vector<128xf32> to vector<1x1x128xf32>
    tpu.vector_store %arg5[%c0_136, %c47, %c0_137], %429 {strides = array<i32>} : memref<1x49x128xf32, #tpu.memory_space<vmem>>, vector<1x1x128xf32>,
    %430 = vector.extract_strided_slice %381 {offsets = [12, 0], sizes = [1, 128], strides = [1, 1]} : vector<14x128xf32> to vector<1x128xf32>
    %431 = vector.shape_cast %430 : vector<1x128xf32> to vector<128xf32>
    %432 = vector.extract_strided_slice %381 {offsets = [13, 0], sizes = [1, 128], strides = [1, 1]} : vector<14x128xf32> to vector<1x128xf32>
    %433 = vector.shape_cast %432 : vector<1x128xf32> to vector<128xf32>
    %434 = arith.maximumf %431, %433 : vector<128xf32>
    %c0_138 = arith.constant 0 : index
    %c48 = arith.constant 48 : index
    %c0_139 = arith.constant 0 : index
    %435 = vector.load %arg5[%c0_138, %c48, %c0_139] : memref<1x49x128xf32, #tpu.memory_space<vmem>>, vector<1x1x128xf32>
    %436 = vector.shape_cast %435 : vector<1x1x128xf32> to vector<128xf32>
    %437 = vector.shape_cast %434 : vector<128xf32> to vector<1x1x128xf32>
    tpu.vector_store %arg5[%c0_138, %c48, %c0_139], %437 {strides = array<i32>} : memref<1x49x128xf32, #tpu.memory_space<vmem>>, vector<1x1x128xf32>,
    return
  }
  func.func @transform_0(%arg0: i32) -> (i32, i32, i32) {
    %c0_i32 = arith.constant 0 : i32
    %c0_i32_0 = arith.constant 0 : i32
    %c0_i32_1 = arith.constant 0 : i32
    return %arg0, %c0_i32, %c0_i32_0 : i32, i32, i32
  }
  func.func @transform_1(%arg0: i32) -> (i32, i32) {
    %c0_i32 = arith.constant 0 : i32
    %c0_i32_0 = arith.constant 0 : i32
    %c0_i32_1 = arith.constant 0 : i32
    return %c0_i32, %c0_i32_0 : i32, i32
  }
  func.func @transform_2(%arg0: i32) -> (i32, i32) {
    %c0_i32 = arith.constant 0 : i32
    %c0_i32_0 = arith.constant 0 : i32
    %c0_i32_1 = arith.constant 0 : i32
    return %c0_i32, %c0_i32_0 : i32, i32
  }
  func.func @transform_3(%arg0: i32) -> (i32, i32, i32) {
    %c0_i32 = arith.constant 0 : i32
    %c0_i32_0 = arith.constant 0 : i32
    %c0_i32_1 = arith.constant 0 : i32
    return %arg0, %c0_i32, %c0_i32_0 : i32, i32, i32
  }
  func.func @transform_4(%arg0: i32) -> (i32, i32, i32) {
    %c0_i32 = arith.constant 0 : i32
    %c0_i32_0 = arith.constant 0 : i32
    %c0_i32_1 = arith.constant 0 : i32
    return %arg0, %c0_i32, %c0_i32_0 : i32, i32, i32
  }
}

</mosaic_0001>

<llo_original>
// kernel: tpu_custom_call.1
$region0: #{tpu_custom_call.1}
  #allocation0 [shape = 'u32[]', space=smem, size = 0x4, offset = 0x4, fixed_abs, tag = 'smem constant byte address 0x4 - core index']
  #allocation1 [shape = 'u32[144,128]{1,0:T(1,128)}', space=vmem, size = 0x12000, scoped, tag = 'internal scratch']
  %s0 = inlined_call_operand.vmem [shape: f32[2,196,128], index: 0, kind: input, shape index: {}]
  %s1 = inlined_call_operand.vmem [shape: bf16[128,512], index: 1, kind: input, shape index: {}]
  %s2 = inlined_call_operand.vmem [shape: f32[1,512], index: 2, kind: input, shape index: {}]
  %s3 = inlined_call_operand.vmem [shape: f32[2,196,512], index: 3, kind: output, shape index: {0}]
  %s4 = inlined_call_operand.vmem [shape: f32[2,49,128], index: 4, kind: output, shape index: {1}]
  %5 = xla_tuple %s3, %s4
  %s6 = sld [smem:[#allocation0]]
  $region53: #{tpu_custom_call.1} parent=0
    _
  %s8 = ssub.s32 1, %s6
  %s9 = scalar_select 0, %s8, %s6
  loop: start=0, step=1, limit=4
  $region2: #{tpu_custom_call.1} parent=0 // loop_pre_header
    _
  $region3: #{tpu_custom_call.1} parent=0 // loop_header
    %s11 = sphi 0, %s15
    %p12 = scmp.ge.s32.totalorder %s11, 4
    %s21 = sphi 0, %s23
    %s24 = sphi 0, %s21
    %s25 = sphi 0, %s24
    %s41 = sphi 0, %s25
    %s45 = sphi 0, %s45
    %s47 = sphi 0, %s45
    %s48 = sphi 0, %s47
    %s62 = sphi 0, %s48
    %s66 = sphi 0, %s66
    %s68 = sphi 0, %s66
    %s69 = sphi 0, %s68
    %s83 = sphi 0, %s69
    %s89 = sphi 0, %s91
    %s92 = sphi 0, %s89
    %s93 = sphi 0, %s92
    %s109 = sphi 0, %s93
    %s115 = sphi 0, %s117
    %s118 = sphi 0, %s115
    %s119 = sphi 0, %s118
    %s135 = sphi 0, %s119
  $region4: #{tpu_custom_call.1} parent=0 // loop_header_branch
    %14 = sbr.rel (%p12) target = $region8
  $region5: #{tpu_custom_call.1} parent=0 // loop_body
    %s16 = ssub.s32 %s11, 1
    %s17 = ssub.s32 %s11, 2
    %s18 = sadd.s32 %s11, 1
    %s19 = ssub.s32 %s11, %s18
    %p20 = scmp.eq.s32.totalorder %s19, 0
    %s22 = sadd.s32 %s21, 1
    %s23 = scalar_select %p20, %s21, %s22
    %p26 = pneg %p20
    %p27 = scmp.eq.s32.totalorder %s11, 1
    %p28 = por %p26, %p27
    %p29 = scmp.ne.s32.totalorder %s21, %s24
    %p30 = scmp.eq.s32.totalorder %s11, 0
    %p31 = por %p29, %p30
    %p32 = scmp.ne.s32.totalorder %s21, %s24
    %p33 = scmp.eq.s32.totalorder %s16, 1
    %p34 = por %p32, %p33
    %p35 = scmp.ne.s32.totalorder %s24, %s25
    %p36 = scmp.eq.s32.totalorder %s16, 0
    %p37 = por %p35, %p36
    %p38 = scmp.ne.s32.totalorder %s24, %s25
    %p39 = scmp.eq.s32.totalorder %s17, 1
    %p40 = por %p38, %p39
    %p42 = scmp.ne.s32.totalorder %s25, %s41
    %p43 = scmp.eq.s32.totalorder %s17, 0
    %p44 = por %p42, %p43
    %s46 = sadd.s32 %s45, 1
    %p49 = scmp.eq.s32.totalorder %s11, 1
    %p50 = scmp.ne.s32.totalorder %s45, %s47
    %p51 = scmp.eq.s32.totalorder %s11, 0
    %p52 = por %p50, %p51
    %p53 = scmp.ne.s32.totalorder %s45, %s47
    %p54 = scmp.eq.s32.totalorder %s16, 1
    %p55 = por %p53, %p54
    %p56 = scmp.ne.s32.totalorder %s47, %s48
    %p57 = scmp.eq.s32.totalorder %s16, 0
    %p58 = por %p56, %p57
    %p59 = scmp.ne.s32.totalorder %s47, %s48
    %p60 = scmp.eq.s32.totalorder %s17, 1
    %p61 = por %p59, %p60
    %p63 = scmp.ne.s32.totalorder %s48, %s62
    %p64 = scmp.eq.s32.totalorder %s17, 0
    %p65 = por %p63, %p64
    %s67 = sadd.s32 %s66, 1
    %p70 = scmp.eq.s32.totalorder %s11, 1
    %p71 = scmp.ne.s32.totalorder %s66, %s68
    %p72 = scmp.eq.s32.totalorder %s11, 0
    %p73 = por %p71, %p72
    %p74 = scmp.ne.s32.totalorder %s66, %s68
    %p75 = scmp.eq.s32.totalorder %s16, 1
    %p76 = por %p74, %p75
    %p77 = scmp.ne.s32.totalorder %s68, %s69
    %p78 = scmp.eq.s32.totalorder %s16, 0
    %p79 = por %p77, %p78
    %p80 = scmp.ne.s32.totalorder %s68, %s69
    %p81 = scmp.eq.s32.totalorder %s17, 1
    %p82 = por %p80, %p81
    %p84 = scmp.ne.s32.totalorder %s69, %s83
    %p85 = scmp.eq.s32.totalorder %s17, 0
    %p86 = por %p84, %p85
    %s87 = ssub.s32 %s11, %s18
    %p88 = scmp.eq.s32.totalorder %s87, 0
    %s90 = sadd.s32 %s89, 1
    %s91 = scalar_select %p88, %s89, %s90
    %p94 = pneg %p88
    %p95 = scmp.eq.s32.totalorder %s11, 1
    %p96 = por %p94, %p95
    %p97 = scmp.ne.s32.totalorder %s89, %s92
    %p98 = scmp.eq.s32.totalorder %s11, 0
    %p99 = por %p97, %p98
    %p100 = scmp.ne.s32.totalorder %s89, %s92
    %p101 = scmp.eq.s32.totalorder %s16, 1
    %p102 = por %p100, %p101
    %p103 = scmp.ne.s32.totalorder %s92, %s93
    %p104 = scmp.eq.s32.totalorder %s16, 0
    %p105 = por %p103, %p104
    %p106 = scmp.ne.s32.totalorder %s92, %s93
    %p107 = scmp.eq.s32.totalorder %s17, 1
    %p108 = por %p106, %p107
    %p110 = scmp.ne.s32.totalorder %s93, %s109
    %p111 = scmp.eq.s32.totalorder %s17, 0
    %p112 = por %p110, %p111
    %s113 = ssub.s32 %s11, %s18
    %p114 = scmp.eq.s32.totalorder %s113, 0
    %s116 = sadd.s32 %s115, 1
    %s117 = scalar_select %p114, %s115, %s116
    %p120 = pneg %p114
    %p121 = scmp.eq.s32.totalorder %s11, 1
    %p122 = por %p120, %p121
    %p123 = scmp.ne.s32.totalorder %s115, %s118
    %p124 = scmp.eq.s32.totalorder %s11, 0
    %p125 = por %p123, %p124
    %p126 = scmp.ne.s32.totalorder %s115, %s118
    %p127 = scmp.eq.s32.totalorder %s16, 1
    %p128 = por %p126, %p127
    %p129 = scmp.ne.s32.totalorder %s118, %s119
    %p130 = scmp.eq.s32.totalorder %s16, 0
    %p131 = por %p129, %p130
    %p132 = scmp.ne.s32.totalorder %s118, %s119
    %p133 = scmp.eq.s32.totalorder %s17, 1
    %p134 = por %p132, %p133
    %p136 = scmp.ne.s32.totalorder %s119, %s135
    %p137 = scmp.eq.s32.totalorder %s17, 0
    %p138 = por %p136, %p137
    %p139 = scmp.le.s32.totalorder 1, %s11
    %p140 = scmp.lt.s32.totalorder %s11, 3
    %p141 = pnand %p139, %p140
    %p142 = pneg %p141
    // Predicated region
    $region9: #{tpu_custom_call.1} parent=5 // pred_check
      _
    $region10: #{tpu_custom_call.1} parent=5 // pred_check_branch
      %144 = sbr.rel (%p141) target = $region12
    $region11: #{tpu_custom_call.1} parent=5 // pred_region
      %s145 = ssub.s32 %s11, 1
      // Predicated region
      $region13: #{tpu_custom_call.1} parent=11 // pred_check
        %p146 = pneg %p58
      $region14: #{tpu_custom_call.1} parent=11 // pred_check_branch
        %148 = sbr.rel (%p146) target = $region16
      $region15: #{tpu_custom_call.1} parent=11 // pred_region
        _
      $region16: #{tpu_custom_call.1} parent=11 // pred_fallthru
        _
      // Predicated region
      $region17: #{tpu_custom_call.1} parent=11 // pred_check
        %p149 = pneg %p79
      $region18: #{tpu_custom_call.1} parent=11 // pred_check_branch
        %151 = sbr.rel (%p149) target = $region20
      $region19: #{tpu_custom_call.1} parent=11 // pred_region
        _
      $region20: #{tpu_custom_call.1} parent=11 // pred_fallthru
        _
    $region12: #{tpu_custom_call.1} parent=5 // pred_fallthru
      _
    %p152 = scmp.lt.s32.totalorder %s11, 2
    // Predicated region
    $region21: #{tpu_custom_call.1} parent=5 // pred_check
      %p153 = pneg %p152
    $region22: #{tpu_custom_call.1} parent=5 // pred_check_branch
      %155 = sbr.rel (%p153) target = $region24
    $region23: #{tpu_custom_call.1} parent=5 // pred_region
      // Predicated region
      $region25: #{tpu_custom_call.1} parent=23 // pred_check
        %p156 = pneg %p31
      $region26: #{tpu_custom_call.1} parent=23 // pred_check_branch
        %158 = sbr.rel (%p156) target = $region28
      $region27: #{tpu_custom_call.1} parent=23 // pred_region
        %p159 = scmp.lt.s32.totalorder %s11, 1
        %s160 = scalar_select %p159, %s11, 1
        %s161 = smul.addr %s160, 25
        %s162 = smul.addr %s161, 8
        %s163 = scalar_lea.vmem %s0, %s162
      $region28: #{tpu_custom_call.1} parent=23 // pred_fallthru
        _
    $region24: #{tpu_custom_call.1} parent=5 // pred_fallthru
      _
    %p164 = scmp.le.s32.totalorder 1, %s11
    %p165 = scmp.lt.s32.totalorder %s11, 3
    %p166 = pnand %p164, %p165
    %p167 = pneg %p166
    // Predicated region
    $region29: #{tpu_custom_call.1} parent=5 // pred_check
      _
    $region30: #{tpu_custom_call.1} parent=5 // pred_check_branch
      %169 = sbr.rel (%p166) target = $region32
    $region31: #{tpu_custom_call.1} parent=5 // pred_region
      %s170 = ssub.s32 %s11, 1
      %p171 = scmp.lt.s32.totalorder %s16, 1
      %s172 = scalar_select %p171, %s16, 1
      %s173 = smul.addr %s172, 25
      %s174 = smul.addr %s173, 8
      %s175 = scalar_lea.vmem %s0, %s174
      %p176 = pneg %p37
      %p177 = pneg %p34
      %p178 = pneg %p58
      %p179 = pneg %p55
      %p180 = pneg %p79
      %p181 = pneg %p76
      %p182 = pneg %p105
      %p183 = pneg %p102
      %p184 = scmp.lt.s32.totalorder %s16, 1
      %s185 = scalar_select %p184, %s16, 1
      %s186 = smul.addr %s185, 100
      %s187 = smul.addr %s186, 8
      %s188 = scalar_lea.vmem %s3, %s187
      %p189 = pneg %p131
      %p190 = pneg %p128
      %p191 = scmp.lt.s32.totalorder %s16, 1
      %s192 = scalar_select %p191, %s16, 1
      %s193 = smul.addr %s192, 7
      %s194 = smul.addr %s193, 8
      %s195 = scalar_lea.vmem %s4, %s194
      %p196 = scmp.lt.s32.totalorder %s16, 1
      %s197 = scalar_select %p196, %s16, 1
      %s198 = smul.addr %s197, 25
      %s199 = smul.addr %s198, 8
      %s200 = scalar_lea.vmem %s0, %s199
      %p201 = scmp.lt.s32.totalorder %s16, 1
      %s202 = scalar_select %p201, %s16, 1
      %s203 = smul.addr %s202, 100
      %s204 = smul.addr %s203, 8
      %s205 = scalar_lea.vmem %s3, %s204
      %p206 = scmp.lt.s32.totalorder %s16, 1
      %s207 = scalar_select %p206, %s16, 1
      %s208 = smul.addr %s207, 7
      %s209 = smul.addr %s208, 8
      %s210 = scalar_lea.vmem %s4, %s209
      %v212 = vld [vmem:[%s200] sm:$0xff]
      %v213 = vld [vmem:[%s200 + $0x8] sm:$0xff]
      %v214 = vld [vmem:[%s200 + $0x10] sm:$0xff]
      %v215 = vld [vmem:[%s200 + $0x18] sm:$0xff]
      %v216 = vld [vmem:[%s200 + $0x20] sm:$0xff]
      %v217 = vld [vmem:[%s200 + $0x28] sm:$0xff]
      %v218 = vld [vmem:[%s200 + $0x30] sm:$0xff]
      %v219 = vld [vmem:[%s200 + $0x38] sm:$0xff]
      %v220 = vld [vmem:[%s200 + $0x40] sm:$0xff]
      %v221 = vld [vmem:[%s200 + $0x48] sm:$0xff]
      %v222 = vld [vmem:[%s200 + $0x50] sm:$0xff]
      %v223 = vld [vmem:[%s200 + $0x58] sm:$0xff]
      %v224 = vld [vmem:[%s200 + $0x60] sm:$0xff]
      %v225 = vld [vmem:[%s200 + $0x68] sm:$0xff]
      %v226 = vld [vmem:[%s200 + $0x70] sm:$0xff]
      %v227 = vld [vmem:[%s200 + $0x78] sm:$0xff]
      %v228 = vld [vmem:[%s200 + $0x80] sm:$0xff]
      %v229 = vld [vmem:[%s200 + $0x88] sm:$0xff]
      %v230 = vld [vmem:[%s200 + $0x90] sm:$0xff]
      %v231 = vld [vmem:[%s200 + $0x98] sm:$0xff]
      %v232 = vld [vmem:[%s200 + $0xa0] sm:$0xff]
      %v233 = vld [vmem:[%s200 + $0xa8] sm:$0xff]
      %v234 = vld [vmem:[%s200 + $0xb0] sm:$0xff]
      %v235 = vld [vmem:[%s200 + $0xb8] sm:$0xff]
      %v236 = vld [vmem:[%s200 + $0xc0] sm:$0xf]
      %v237 = vpack.c.bf16 %v213, %v212
      %v238 = vpack.c.bf16 %v215, %v214
      %v239 = vpack.c.bf16 %v217, %v216
      %v240 = vpack.c.bf16 %v219, %v218
      %v241 = vpack.c.bf16 %v221, %v220
      %v242 = vpack.c.bf16 %v223, %v222
      %v243 = vpack.c.bf16 %v225, %v224
      %v244 = vpack.c.bf16 %v227, %v226
      %v245 = vpack.c.bf16 %v229, %v228
      %v246 = vpack.c.bf16 %v231, %v230
      %v247 = vpack.c.bf16 %v233, %v232
      %v248 = vpack.c.bf16 %v235, %v234
      %v249 = vpack.c.bf16 %v236, %v236
      %v250 = vld [vmem:[%s1] sm:$0xff]
      %v251 = vld [vmem:[%s1 + $0x8] sm:$0xff]
      %v252 = vld [vmem:[%s1 + $0x10] sm:$0xff]
      %v253 = vld [vmem:[%s1 + $0x18] sm:$0xff]
      %v254 = vld [vmem:[%s1 + $0x20] sm:$0xff]
      %v255 = vld [vmem:[%s1 + $0x28] sm:$0xff]
      %v256 = vld [vmem:[%s1 + $0x30] sm:$0xff]
      %v257 = vld [vmem:[%s1 + $0x38] sm:$0xff]
      %v258 = vld [vmem:[%s1 + $0x40] sm:$0xff]
      %v259 = vld [vmem:[%s1 + $0x48] sm:$0xff]
      %v260 = vld [vmem:[%s1 + $0x50] sm:$0xff]
      %v261 = vld [vmem:[%s1 + $0x58] sm:$0xff]
      %v262 = vld [vmem:[%s1 + $0x60] sm:$0xff]
      %v263 = vld [vmem:[%s1 + $0x68] sm:$0xff]
      %v264 = vld [vmem:[%s1 + $0x70] sm:$0xff]
      %v265 = vld [vmem:[%s1 + $0x78] sm:$0xff]
      %v266 = vld [vmem:[%s1 + $0x80] sm:$0xff]
      %v267 = vld [vmem:[%s1 + $0x88] sm:$0xff]
      %v268 = vld [vmem:[%s1 + $0x90] sm:$0xff]
      %v269 = vld [vmem:[%s1 + $0x98] sm:$0xff]
      %v270 = vld [vmem:[%s1 + $0xa0] sm:$0xff]
      %v271 = vld [vmem:[%s1 + $0xa8] sm:$0xff]
      %v272 = vld [vmem:[%s1 + $0xb0] sm:$0xff]
      %v273 = vld [vmem:[%s1 + $0xb8] sm:$0xff]
      %v274 = vld [vmem:[%s1 + $0xc0] sm:$0xff]
      %v275 = vld [vmem:[%s1 + $0xc8] sm:$0xff]
      %v276 = vld [vmem:[%s1 + $0xd0] sm:$0xff]
      %v277 = vld [vmem:[%s1 + $0xd8] sm:$0xff]
      %v278 = vld [vmem:[%s1 + $0xe0] sm:$0xff]
      %v279 = vld [vmem:[%s1 + $0xe8] sm:$0xff]
      %v280 = vld [vmem:[%s1 + $0xf0] sm:$0xff]
      %v281 = vld [vmem:[%s1 + $0xf8] sm:$0xff]
      %v282 = vld [vmem:[%s2] sm:$0xf]
      %v284 = vlaneseq
      %v285 = vshrl.u32 %v284, 7
      %v286 = vsub.s32 0, %v285
      %v287 = vrot.slane %v282, %v286
      %v288 = vlaneseq
      %v289 = vshrl.u32 %v288, 7
      %v290 = vsub.s32 1, %v289
      %v291 = vrot.slane %v282, %v290
      %v292 = vlaneseq
      %v293 = vshrl.u32 %v292, 7
      %v294 = vsub.s32 2, %v293
      %v295 = vrot.slane %v282, %v294
      %v296 = vlaneseq
      %v297 = vshrl.u32 %v296, 7
      %v298 = vsub.s32 3, %v297
      %v299 = vrot.slane %v282, %v298
      %v336 = vunpack.c.l.b16 %v250
      %v337 = vunpack.c.h.b16 %v250
      %v338 = vunpack.c.l.b16 %v251
      %v339 = vunpack.c.h.b16 %v251
      %v340 = vunpack.c.l.b16 %v252
      %v341 = vunpack.c.h.b16 %v252
      %v342 = vunpack.c.l.b16 %v253
      %v343 = vunpack.c.h.b16 %v253
      %v344 = vunpack.c.l.b16 %v254
      %v345 = vunpack.c.h.b16 %v254
      %v346 = vunpack.c.l.b16 %v255
      %v347 = vunpack.c.h.b16 %v255
      %v348 = vunpack.c.l.b16 %v256
      %v349 = vunpack.c.h.b16 %v256
      %v350 = vunpack.c.l.b16 %v257
      %v351 = vunpack.c.h.b16 %v257
      %v352 = vunpack.c.l.b16 %v258
      %v353 = vunpack.c.h.b16 %v258
      %v354 = vunpack.c.l.b16 %v259
      %v355 = vunpack.c.h.b16 %v259
      %v356 = vunpack.c.l.b16 %v260
      %v357 = vunpack.c.h.b16 %v260
      %v358 = vunpack.c.l.b16 %v261
      %v359 = vunpack.c.h.b16 %v261
      %v360 = vunpack.c.l.b16 %v262
      %v361 = vunpack.c.h.b16 %v262
      %v362 = vunpack.c.l.b16 %v263
      %v363 = vunpack.c.h.b16 %v263
      %v364 = vunpack.c.l.b16 %v264
      %v365 = vunpack.c.h.b16 %v264
      %v366 = vunpack.c.l.b16 %v265
      %v367 = vunpack.c.h.b16 %v265
      %v368 = vunpack.c.l.b16 %v266
      %v369 = vunpack.c.h.b16 %v266
      %v370 = vunpack.c.l.b16 %v267
      %v371 = vunpack.c.h.b16 %v267
      %v372 = vunpack.c.l.b16 %v268
      %v373 = vunpack.c.h.b16 %v268
      %v374 = vunpack.c.l.b16 %v269
      %v375 = vunpack.c.h.b16 %v269
      %v376 = vunpack.c.l.b16 %v270
      %v377 = vunpack.c.h.b16 %v270
      %v378 = vunpack.c.l.b16 %v271
      %v379 = vunpack.c.h.b16 %v271
      %v380 = vunpack.c.l.b16 %v272
      %v381 = vunpack.c.h.b16 %v272
      %v382 = vunpack.c.l.b16 %v273
      %v383 = vunpack.c.h.b16 %v273
      %v384 = vunpack.c.l.b16 %v274
      %v385 = vunpack.c.h.b16 %v274
      %v386 = vunpack.c.l.b16 %v275
      %v387 = vunpack.c.h.b16 %v275
      %v388 = vunpack.c.l.b16 %v276
      %v389 = vunpack.c.h.b16 %v276
      %v390 = vunpack.c.l.b16 %v277
      %v391 = vunpack.c.h.b16 %v277
      %v392 = vunpack.c.l.b16 %v278
      %v393 = vunpack.c.h.b16 %v278
      %v394 = vunpack.c.l.b16 %v279
      %v395 = vunpack.c.h.b16 %v279
      %v396 = vunpack.c.l.b16 %v280
      %v397 = vunpack.c.h.b16 %v280
      %v398 = vunpack.c.l.b16 %v281
      %v399 = vunpack.c.h.b16 %v281
      %v400 = vpack.c.b16 %v340, %v336
      %v401 = vpack.c.b16 %v341, %v337
      %v402 = vpack.c.b16 %v342, %v338
      %v403 = vpack.c.b16 %v343, %v339
      %v404 = vpack.c.b16 %v348, %v344
      %v405 = vpack.c.b16 %v349, %v345
      %v406 = vpack.c.b16 %v350, %v346
      %v407 = vpack.c.b16 %v351, %v347
      %v408 = vpack.c.b16 %v356, %v352
      %v409 = vpack.c.b16 %v357, %v353
      %v410 = vpack.c.b16 %v358, %v354
      %v411 = vpack.c.b16 %v359, %v355
      %v412 = vpack.c.b16 %v364, %v360
      %v413 = vpack.c.b16 %v365, %v361
      %v414 = vpack.c.b16 %v366, %v362
      %v415 = vpack.c.b16 %v367, %v363
      %v416 = vpack.c.b16 %v372, %v368
      %v417 = vpack.c.b16 %v373, %v369
      %v418 = vpack.c.b16 %v374, %v370
      %v419 = vpack.c.b16 %v375, %v371
      %v420 = vpack.c.b16 %v380, %v376
      %v421 = vpack.c.b16 %v381, %v377
      %v422 = vpack.c.b16 %v382, %v378
      %v423 = vpack.c.b16 %v383, %v379
      %v424 = vpack.c.b16 %v388, %v384
      %v425 = vpack.c.b16 %v389, %v385
      %v426 = vpack.c.b16 %v390, %v386
      %v427 = vpack.c.b16 %v391, %v387
      %v428 = vpack.c.b16 %v396, %v392
      %v429 = vpack.c.b16 %v397, %v393
      %v430 = vpack.c.b16 %v398, %v394
      %v431 = vpack.c.b16 %v399, %v395
      %464 = vmatprep.subr.bf16.mxu0 %v401
      %465 = vmatpush1.bf16.msra.mxu0 %v400
      %466 = vmatprep.subr.bf16.mxu0 %v405
      %467 = vmatpush1.bf16.msra.mxu0 %v404
      %468 = vmatprep.subr.bf16.mxu0 %v409
      %469 = vmatpush1.bf16.msra.mxu0 %v408
      %470 = vmatprep.subr.bf16.mxu0 %v413
      %471 = vmatpush1.bf16.msra.mxu0 %v412
      %472 = vmatprep.subr.bf16.mxu0 %v417
      %473 = vmatpush1.bf16.msra.mxu0 %v416
      %474 = vmatprep.subr.bf16.mxu0 %v421
      %475 = vmatpush1.bf16.msra.mxu0 %v420
      %476 = vmatprep.subr.bf16.mxu0 %v425
      %477 = vmatpush1.bf16.msra.mxu0 %v424
      %478 = vmatprep.subr.bf16.mxu0 %v429
      %479 = vmatpush1.bf16.msra.mxu0 %v428
      %480 = vmatprep.subr.bf16.mxu0 0
      %481 = vmatpush1.bf16.msra.mxu0 0
      %482 = vmatprep.subr.bf16.mxu0 0
      %483 = vmatpush1.bf16.msra.mxu0 0
      %484 = vmatprep.subr.bf16.mxu0 0
      %485 = vmatpush1.bf16.msra.mxu0 0
      %486 = vmatprep.subr.bf16.mxu0 0
      %487 = vmatpush1.bf16.msra.mxu0 0
      %488 = vmatprep.subr.bf16.mxu0 0
      %489 = vmatpush1.bf16.msra.mxu0 0
      %490 = vmatprep.subr.bf16.mxu0 0
      %491 = vmatpush1.bf16.msra.mxu0 0
      %492 = vmatprep.subr.bf16.mxu0 0
      %493 = vmatpush1.bf16.msra.mxu0 0
      %494 = vmatprep.subr.bf16.mxu0 0
      %495 = vmatpush1.bf16.msra.mxu0 0
      %496 = vmatprep.mubr.bf16.mxu0 0
      %497 = vmatmul.mubr.bf16.gmra.mrb[0].mxu0 %v237
      %v498 = vpop.f32.mrb[0].mxu0
      %v499 = vadd.f32 %v287, %v498
      %v500 = vpop.f32.mrb[0].mxu0
      %v501 = vadd.f32 %v291, %v500
      %v502 = vpop.f32.mrb[0].mxu0
      %v503 = vadd.f32 %v287, %v502
      %v504 = vpop.f32.mrb[0].mxu0
      %v505 = vadd.f32 %v291, %v504
      %506 = vmatprep.mubr.bf16.mxu0 0
      %507 = vmatmul.mubr.bf16.gmra.mrb[0].mxu0 %v238
      %v508 = vpop.f32.mrb[0].mxu0
      %v509 = vadd.f32 %v287, %v508
      %v510 = vpop.f32.mrb[0].mxu0
      %v511 = vadd.f32 %v291, %v510
      %v512 = vpop.f32.mrb[0].mxu0
      %v513 = vadd.f32 %v287, %v512
      %v514 = vpop.f32.mrb[0].mxu0
      %v515 = vadd.f32 %v291, %v514
      %516 = vmatprep.mubr.bf16.mxu0 0
      %517 = vmatmul.mubr.bf16.gmra.mrb[0].mxu0 %v239
      %v518 = vpop.f32.mrb[0].mxu0
      %v519 = vadd.f32 %v287, %v518
      %v520 = vpop.f32.mrb[0].mxu0
      %v521 = vadd.f32 %v291, %v520
      %v522 = vpop.f32.mrb[0].mxu0
      %v523 = vadd.f32 %v287, %v522
      %v524 = vpop.f32.mrb[0].mxu0
      %v525 = vadd.f32 %v291, %v524
      %526 = vmatprep.mubr.bf16.mxu0 0
      %527 = vmatmul.mubr.bf16.gmra.mrb[0].mxu0 %v240
      %v528 = vpop.f32.mrb[0].mxu0
      %v529 = vadd.f32 %v287, %v528
      %v530 = vpop.f32.mrb[0].mxu0
      %v531 = vadd.f32 %v291, %v530
      %v532 = vpop.f32.mrb[0].mxu0
      %v533 = vadd.f32 %v287, %v532
      %v534 = vpop.f32.mrb[0].mxu0
      %v535 = vadd.f32 %v291, %v534
      %536 = vmatprep.mubr.bf16.mxu0 0
      %537 = vmatmul.mubr.bf16.gmra.mrb[0].mxu0 %v241
      %v538 = vpop.f32.mrb[0].mxu0
      %v539 = vadd.f32 %v287, %v538
      %v540 = vpop.f32.mrb[0].mxu0
      %v541 = vadd.f32 %v291, %v540
      %v542 = vpop.f32.mrb[0].mxu0
      %v543 = vadd.f32 %v287, %v542
      %v544 = vpop.f32.mrb[0].mxu0
      %v545 = vadd.f32 %v291, %v544
      %546 = vmatprep.mubr.bf16.mxu0 0
      %547 = vmatmul.mubr.bf16.gmra.mrb[0].mxu0 %v242
      %v548 = vpop.f32.mrb[0].mxu0
      %v549 = vadd.f32 %v287, %v548
      %v550 = vpop.f32.mrb[0].mxu0
      %v551 = vadd.f32 %v291, %v550
      %v552 = vpop.f32.mrb[0].mxu0
      %v553 = vadd.f32 %v287, %v552
      %v554 = vpop.f32.mrb[0].mxu0
      %v555 = vadd.f32 %v291, %v554
      %556 = vmatprep.mubr.bf16.mxu0 0
      %557 = vmatmul.mubr.bf16.gmra.mrb[0].mxu0 %v243
      %v558 = vpop.f32.mrb[0].mxu0
      %v559 = vadd.f32 %v287, %v558
      %v560 = vpop.f32.mrb[0].mxu0
      %v561 = vadd.f32 %v291, %v560
      %v562 = vpop.f32.mrb[0].mxu0
      %v563 = vadd.f32 %v287, %v562
      %v564 = vpop.f32.mrb[0].mxu0
      %v565 = vadd.f32 %v291, %v564
      %566 = vmatprep.mubr.bf16.mxu0 0
      %567 = vmatmul.mubr.bf16.gmra.mrb[0].mxu0 %v244
      %v568 = vpop.f32.mrb[0].mxu0
      %v569 = vadd.f32 %v287, %v568
      %v570 = vpop.f32.mrb[0].mxu0
      %v571 = vadd.f32 %v291, %v570
      %v572 = vpop.f32.mrb[0].mxu0
      %v573 = vadd.f32 %v287, %v572
      %v574 = vpop.f32.mrb[0].mxu0
      %v575 = vadd.f32 %v291, %v574
      %576 = vmatprep.mubr.bf16.mxu0 0
      %577 = vmatmul.mubr.bf16.gmra.mrb[0].mxu0 %v245
      %v578 = vpop.f32.mrb[0].mxu0
      %v579 = vadd.f32 %v287, %v578
      %v580 = vpop.f32.mrb[0].mxu0
      %v581 = vadd.f32 %v291, %v580
      %v582 = vpop.f32.mrb[0].mxu0
      %v583 = vadd.f32 %v287, %v582
      %v584 = vpop.f32.mrb[0].mxu0
      %v585 = vadd.f32 %v291, %v584
      %586 = vmatprep.mubr.bf16.mxu0 0
      %587 = vmatmul.mubr.bf16.gmra.mrb[0].mxu0 %v246
      %v588 = vpop.f32.mrb[0].mxu0
      %v589 = vadd.f32 %v287, %v588
      %v590 = vpop.f32.mrb[0].mxu0
      %v591 = vadd.f32 %v291, %v590
      %v592 = vpop.f32.mrb[0].mxu0
      %v593 = vadd.f32 %v287, %v592
      %v594 = vpop.f32.mrb[0].mxu0
      %v595 = vadd.f32 %v291, %v594
      %596 = vmatprep.mubr.bf16.mxu0 0
      %597 = vmatmul.mubr.bf16.gmra.mrb[0].mxu0 %v247
      %v598 = vpop.f32.mrb[0].mxu0
      %v599 = vadd.f32 %v287, %v598
      %v600 = vpop.f32.mrb[0].mxu0
      %v601 = vadd.f32 %v291, %v600
      %v602 = vpop.f32.mrb[0].mxu0
      %v603 = vadd.f32 %v287, %v602
      %v604 = vpop.f32.mrb[0].mxu0
      %v605 = vadd.f32 %v291, %v604
      %606 = vmatprep.mubr.bf16.mxu0 0
      %607 = vmatmul.mubr.bf16.gmra.mrb[0].mxu0 %v248
      %v608 = vpop.f32.mrb[0].mxu0
      %v609 = vadd.f32 %v287, %v608
      %v610 = vpop.f32.mrb[0].mxu0
      %v611 = vadd.f32 %v291, %v610
      %v612 = vpop.f32.mrb[0].mxu0
      %v613 = vadd.f32 %v287, %v612
      %v614 = vpop.f32.mrb[0].mxu0
      %v615 = vadd.f32 %v291, %v614
      %616 = vmatprep.mubr.bf16.mxu0 0
      %617 = vmatmul.mubr.bf16.gmra.mrb[0].mxu0 %v249
      %v618 = vpop.f32.mrb[0].mxu0
      %v619 = vadd.f32 %v287, %v618
      %v620 = vpop.f32.mrb[0].mxu0
      %v621 = vadd.f32 %v291, %v620
      %v622 = vpop.f32.mrb[0].mxu0
      %v623 = vpop.f32.mrb[0].mxu0
      %624 = vdwg.mxu0
      %625 = vmatprep.subr.bf16.mxu0 %v403
      %626 = vmatpush1.bf16.msra.mxu0 %v402
      %627 = vmatprep.subr.bf16.mxu0 %v407
      %628 = vmatpush1.bf16.msra.mxu0 %v406
      %629 = vmatprep.subr.bf16.mxu0 %v411
      %630 = vmatpush1.bf16.msra.mxu0 %v410
      %631 = vmatprep.subr.bf16.mxu0 %v415
      %632 = vmatpush1.bf16.msra.mxu0 %v414
      %633 = vmatprep.subr.bf16.mxu0 %v419
      %634 = vmatpush1.bf16.msra.mxu0 %v418
      %635 = vmatprep.subr.bf16.mxu0 %v423
      %636 = vmatpush1.bf16.msra.mxu0 %v422
      %637 = vmatprep.subr.bf16.mxu0 %v427
      %638 = vmatpush1.bf16.msra.mxu0 %v426
      %639 = vmatprep.subr.bf16.mxu0 %v431
      %640 = vmatpush1.bf16.msra.mxu0 %v430
      %641 = vmatprep.subr.bf16.mxu0 0
      %642 = vmatpush1.bf16.msra.mxu0 0
      %643 = vmatprep.subr.bf16.mxu0 0
      %644 = vmatpush1.bf16.msra.mxu0 0
      %645 = vmatprep.subr.bf16.mxu0 0
      %646 = vmatpush1.bf16.msra.mxu0 0
      %647 = vmatprep.subr.bf16.mxu0 0
      %648 = vmatpush1.bf16.msra.mxu0 0
      %649 = vmatprep.subr.bf16.mxu0 0
      %650 = vmatpush1.bf16.msra.mxu0 0
      %651 = vmatprep.subr.bf16.mxu0 0
      %652 = vmatpush1.bf16.msra.mxu0 0
      %653 = vmatprep.subr.bf16.mxu0 0
      %654 = vmatpush1.bf16.msra.mxu0 0
      %655 = vmatprep.subr.bf16.mxu0 0
      %656 = vmatpush1.bf16.msra.mxu0 0
      %657 = vmatprep.mubr.bf16.mxu0 0
      %658 = vmatmul.mubr.bf16.gmra.mrb[0].mxu0 %v237
      %v659 = vpop.f32.mrb[0].mxu0
      %v660 = vadd.f32 %v295, %v659
      %v661 = vpop.f32.mrb[0].mxu0
      %v662 = vadd.f32 %v299, %v661
      %v663 = vpop.f32.mrb[0].mxu0
      %v664 = vadd.f32 %v295, %v663
      %v665 = vpop.f32.mrb[0].mxu0
      %v666 = vadd.f32 %v299, %v665
      %667 = vmatprep.mubr.bf16.mxu0 0
      %668 = vmatmul.mubr.bf16.gmra.mrb[0].mxu0 %v238
      %v669 = vpop.f32.mrb[0].mxu0
      %v670 = vadd.f32 %v295, %v669
      %v671 = vpop.f32.mrb[0].mxu0
      %v672 = vadd.f32 %v299, %v671
      %v673 = vpop.f32.mrb[0].mxu0
      %v674 = vadd.f32 %v295, %v673
      %v675 = vpop.f32.mrb[0].mxu0
      %v676 = vadd.f32 %v299, %v675
      %677 = vmatprep.mubr.bf16.mxu0 0
      %678 = vmatmul.mubr.bf16.gmra.mrb[0].mxu0 %v239
      %v679 = vpop.f32.mrb[0].mxu0
      %v680 = vadd.f32 %v295, %v679
      %v681 = vpop.f32.mrb[0].mxu0
      %v682 = vadd.f32 %v299, %v681
      %v683 = vpop.f32.mrb[0].mxu0
      %v684 = vadd.f32 %v295, %v683
      %v685 = vpop.f32.mrb[0].mxu0
      %v686 = vadd.f32 %v299, %v685
      %687 = vmatprep.mubr.bf16.mxu0 0
      %688 = vmatmul.mubr.bf16.gmra.mrb[0].mxu0 %v240
      %v689 = vpop.f32.mrb[0].mxu0
      %v690 = vadd.f32 %v295, %v689
      %v691 = vpop.f32.mrb[0].mxu0
      %v692 = vadd.f32 %v299, %v691
      %v693 = vpop.f32.mrb[0].mxu0
      %v694 = vadd.f32 %v295, %v693
      %v695 = vpop.f32.mrb[0].mxu0
      %v696 = vadd.f32 %v299, %v695
      %697 = vmatprep.mubr.bf16.mxu0 0
      %698 = vmatmul.mubr.bf16.gmra.mrb[0].mxu0 %v241
      %v699 = vpop.f32.mrb[0].mxu0
      %v700 = vadd.f32 %v295, %v699
      %v701 = vpop.f32.mrb[0].mxu0
      %v702 = vadd.f32 %v299, %v701
      %v703 = vpop.f32.mrb[0].mxu0
      %v704 = vadd.f32 %v295, %v703
      %v705 = vpop.f32.mrb[0].mxu0
      %v706 = vadd.f32 %v299, %v705
      %707 = vmatprep.mubr.bf16.mxu0 0
      %708 = vmatmul.mubr.bf16.gmra.mrb[0].mxu0 %v242
      %v709 = vpop.f32.mrb[0].mxu0
      %v710 = vadd.f32 %v295, %v709
      %v711 = vpop.f32.mrb[0].mxu0
      %v712 = vadd.f32 %v299, %v711
      %v713 = vpop.f32.mrb[0].mxu0
      %v714 = vadd.f32 %v295, %v713
      %v715 = vpop.f32.mrb[0].mxu0
      %v716 = vadd.f32 %v299, %v715
      %717 = vmatprep.mubr.bf16.mxu0 0
      %718 = vmatmul.mubr.bf16.gmra.mrb[0].mxu0 %v243
      %v719 = vpop.f32.mrb[0].mxu0
      %v720 = vadd.f32 %v295, %v719
      %v721 = vpop.f32.mrb[0].mxu0
      %v722 = vadd.f32 %v299, %v721
      %v723 = vpop.f32.mrb[0].mxu0
      %v724 = vadd.f32 %v295, %v723
      %v725 = vpop.f32.mrb[0].mxu0
      %v726 = vadd.f32 %v299, %v725
      %727 = vmatprep.mubr.bf16.mxu0 0
      %728 = vmatmul.mubr.bf16.gmra.mrb[0].mxu0 %v244
      %v729 = vpop.f32.mrb[0].mxu0
      %v730 = vadd.f32 %v295, %v729
      %v731 = vpop.f32.mrb[0].mxu0
      %v732 = vadd.f32 %v299, %v731
      %v733 = vpop.f32.mrb[0].mxu0
      %v734 = vadd.f32 %v295, %v733
      %v735 = vpop.f32.mrb[0].mxu0
      %v736 = vadd.f32 %v299, %v735
      %737 = vmatprep.mubr.bf16.mxu0 0
      %738 = vmatmul.mubr.bf16.gmra.mrb[0].mxu0 %v245
      %v739 = vpop.f32.mrb[0].mxu0
      %v740 = vadd.f32 %v295, %v739
      %v741 = vpop.f32.mrb[0].mxu0
      %v742 = vadd.f32 %v299, %v741
      %v743 = vpop.f32.mrb[0].mxu0
      %v744 = vadd.f32 %v295, %v743
      %v745 = vpop.f32.mrb[0].mxu0
      %v746 = vadd.f32 %v299, %v745
      %747 = vmatprep.mubr.bf16.mxu0 0
      %748 = vmatmul.mubr.bf16.gmra.mrb[0].mxu0 %v246
      %v749 = vpop.f32.mrb[0].mxu0
      %v750 = vadd.f32 %v295, %v749
      %v751 = vpop.f32.mrb[0].mxu0
      %v752 = vadd.f32 %v299, %v751
      %v753 = vpop.f32.mrb[0].mxu0
      %v754 = vadd.f32 %v295, %v753
      %v755 = vpop.f32.mrb[0].mxu0
      %v756 = vadd.f32 %v299, %v755
      %757 = vmatprep.mubr.bf16.mxu0 0
      %758 = vmatmul.mubr.bf16.gmra.mrb[0].mxu0 %v247
      %v759 = vpop.f32.mrb[0].mxu0
      %v760 = vadd.f32 %v295, %v759
      %v761 = vpop.f32.mrb[0].mxu0
      %v762 = vadd.f32 %v299, %v761
      %v763 = vpop.f32.mrb[0].mxu0
      %v764 = vadd.f32 %v295, %v763
      %v765 = vpop.f32.mrb[0].mxu0
      %v766 = vadd.f32 %v299, %v765
      %767 = vmatprep.mubr.bf16.mxu0 0
      %768 = vmatmul.mubr.bf16.gmra.mrb[0].mxu0 %v248
      %v769 = vpop.f32.mrb[0].mxu0
      %v770 = vadd.f32 %v295, %v769
      %v771 = vpop.f32.mrb[0].mxu0
      %v772 = vadd.f32 %v299, %v771
      %v773 = vpop.f32.mrb[0].mxu0
      %v774 = vadd.f32 %v295, %v773
      %v775 = vpop.f32.mrb[0].mxu0
      %v776 = vadd.f32 %v299, %v775
      %777 = vmatprep.mubr.bf16.mxu0 0
      %778 = vmatmul.mubr.bf16.gmra.mrb[0].mxu0 %v249
      %v779 = vpop.f32.mrb[0].mxu0
      %v780 = vadd.f32 %v295, %v779
      %v781 = vpop.f32.mrb[0].mxu0
      %v782 = vadd.f32 %v299, %v781
      %v783 = vpop.f32.mrb[0].mxu0
      %v784 = vpop.f32.mrb[0].mxu0
      %785 = vdwg.mxu0
      %786 = vst [vmem:[%s205] sm:$0xff] %v499
      %787 = vst [vmem:[%s205 + $0x8] sm:$0xff] %v501
      %788 = vst [vmem:[%s205 + $0x10] sm:$0xff] %v660
      %789 = vst [vmem:[%s205 + $0x18] sm:$0xff] %v662
      %790 = vst [vmem:[%s205 + $0x20] sm:$0xff] %v503
      %791 = vst [vmem:[%s205 + $0x28] sm:$0xff] %v505
      %792 = vst [vmem:[%s205 + $0x30] sm:$0xff] %v664
      %793 = vst [vmem:[%s205 + $0x38] sm:$0xff] %v666
      %794 = vst [vmem:[%s205 + $0x40] sm:$0xff] %v509
      %795 = vst [vmem:[%s205 + $0x48] sm:$0xff] %v511
      %796 = vst [vmem:[%s205 + $0x50] sm:$0xff] %v670
      %797 = vst [vmem:[%s205 + $0x58] sm:$0xff] %v672
      %798 = vst [vmem:[%s205 + $0x60] sm:$0xff] %v513
      %799 = vst [vmem:[%s205 + $0x68] sm:$0xff] %v515
      %800 = vst [vmem:[%s205 + $0x70] sm:$0xff] %v674
      %801 = vst [vmem:[%s205 + $0x78] sm:$0xff] %v676
      %802 = vst [vmem:[%s205 + $0x80] sm:$0xff] %v519
      %803 = vst [vmem:[%s205 + $0x88] sm:$0xff] %v521
      %804 = vst [vmem:[%s205 + $0x90] sm:$0xff] %v680
      %805 = vst [vmem:[%s205 + $0x98] sm:$0xff] %v682
      %806 = vst [vmem:[%s205 + $0xa0] sm:$0xff] %v523
      %807 = vst [vmem:[%s205 + $0xa8] sm:$0xff] %v525
      %808 = vst [vmem:[%s205 + $0xb0] sm:$0xff] %v684
      %809 = vst [vmem:[%s205 + $0xb8] sm:$0xff] %v686
      %810 = vst [vmem:[%s205 + $0xc0] sm:$0xff] %v529
      %811 = vst [vmem:[%s205 + $0xc8] sm:$0xff] %v531
      %812 = vst [vmem:[%s205 + $0xd0] sm:$0xff] %v690
      %813 = vst [vmem:[%s205 + $0xd8] sm:$0xff] %v692
      %814 = vst [vmem:[%s205 + $0xe0] sm:$0xff] %v533
      %815 = vst [vmem:[%s205 + $0xe8] sm:$0xff] %v535
      %816 = vst [vmem:[%s205 + $0xf0] sm:$0xff] %v694
      %817 = vst [vmem:[%s205 + $0xf8] sm:$0xff] %v696
      %818 = vst [vmem:[%s205 + $0x100] sm:$0xff] %v539
      %819 = vst [vmem:[%s205 + $0x108] sm:$0xff] %v541
      %820 = vst [vmem:[%s205 + $0x110] sm:$0xff] %v700
      %821 = vst [vmem:[%s205 + $0x118] sm:$0xff] %v702
      %822 = vst [vmem:[%s205 + $0x120] sm:$0xff] %v543
      %823 = vst [vmem:[%s205 + $0x128] sm:$0xff] %v545
      %824 = vst [vmem:[%s205 + $0x130] sm:$0xff] %v704
      %825 = vst [vmem:[%s205 + $0x138] sm:$0xff] %v706
      %826 = vst [vmem:[%s205 + $0x140] sm:$0xff] %v549
      %827 = vst [vmem:[%s205 + $0x148] sm:$0xff] %v551
      %828 = vst [vmem:[%s205 + $0x150] sm:$0xff] %v710
      %829 = vst [vmem:[%s205 + $0x158] sm:$0xff] %v712
      %830 = vst [vmem:[%s205 + $0x160] sm:$0xff] %v553
      %831 = vst [vmem:[%s205 + $0x168] sm:$0xff] %v555
      %832 = vst [vmem:[%s205 + $0x170] sm:$0xff] %v714
      %833 = vst [vmem:[%s205 + $0x178] sm:$0xff] %v716
      %834 = vst [vmem:[%s205 + $0x180] sm:$0xff] %v559
      %835 = vst [vmem:[%s205 + $0x188] sm:$0xff] %v561
      %836 = vst [vmem:[%s205 + $0x190] sm:$0xff] %v720
      %837 = vst [vmem:[%s205 + $0x198] sm:$0xff] %v722
      %838 = vst [vmem:[%s205 + $0x1a0] sm:$0xff] %v563
      %839 = vst [vmem:[%s205 + $0x1a8] sm:$0xff] %v565
      %840 = vst [vmem:[%s205 + $0x1b0] sm:$0xff] %v724
      %841 = vst [vmem:[%s205 + $0x1b8] sm:$0xff] %v726
      %842 = vst [vmem:[%s205 + $0x1c0] sm:$0xff] %v569
      %843 = vst [vmem:[%s205 + $0x1c8] sm:$0xff] %v571
      %844 = vst [vmem:[%s205 + $0x1d0] sm:$0xff] %v730
      %845 = vst [vmem:[%s205 + $0x1d8] sm:$0xff] %v732
      %846 = vst [vmem:[%s205 + $0x1e0] sm:$0xff] %v573
      %847 = vst [vmem:[%s205 + $0x1e8] sm:$0xff] %v575
      %848 = vst [vmem:[%s205 + $0x1f0] sm:$0xff] %v734
      %849 = vst [vmem:[%s205 + $0x1f8] sm:$0xff] %v736
      %850 = vst [vmem:[%s205 + $0x200] sm:$0xff] %v579
      %851 = vst [vmem:[%s205 + $0x208] sm:$0xff] %v581
      %852 = vst [vmem:[%s205 + $0x210] sm:$0xff] %v740
      %853 = vst [vmem:[%s205 + $0x218] sm:$0xff] %v742
      %854 = vst [vmem:[%s205 + $0x220] sm:$0xff] %v583
      %855 = vst [vmem:[%s205 + $0x228] sm:$0xff] %v585
      %856 = vst [vmem:[%s205 + $0x230] sm:$0xff] %v744
      %857 = vst [vmem:[%s205 + $0x238] sm:$0xff] %v746
      %858 = vst [vmem:[%s205 + $0x240] sm:$0xff] %v589
      %859 = vst [vmem:[%s205 + $0x248] sm:$0xff] %v591
      %860 = vst [vmem:[%s205 + $0x250] sm:$0xff] %v750
      %861 = vst [vmem:[%s205 + $0x258] sm:$0xff] %v752
      %862 = vst [vmem:[%s205 + $0x260] sm:$0xff] %v593
      %863 = vst [vmem:[%s205 + $0x268] sm:$0xff] %v595
      %864 = vst [vmem:[%s205 + $0x270] sm:$0xff] %v754
      %865 = vst [vmem:[%s205 + $0x278] sm:$0xff] %v756
      %866 = vst [vmem:[%s205 + $0x280] sm:$0xff] %v599
      %867 = vst [vmem:[%s205 + $0x288] sm:$0xff] %v601
      %868 = vst [vmem:[%s205 + $0x290] sm:$0xff] %v760
      %869 = vst [vmem:[%s205 + $0x298] sm:$0xff] %v762
      %870 = vst [vmem:[%s205 + $0x2a0] sm:$0xff] %v603
      %871 = vst [vmem:[%s205 + $0x2a8] sm:$0xff] %v605
      %872 = vst [vmem:[%s205 + $0x2b0] sm:$0xff] %v764
      %873 = vst [vmem:[%s205 + $0x2b8] sm:$0xff] %v766
      %874 = vst [vmem:[%s205 + $0x2c0] sm:$0xff] %v609
      %875 = vst [vmem:[%s205 + $0x2c8] sm:$0xff] %v611
      %876 = vst [vmem:[%s205 + $0x2d0] sm:$0xff] %v770
      %877 = vst [vmem:[%s205 + $0x2d8] sm:$0xff] %v772
      %878 = vst [vmem:[%s205 + $0x2e0] sm:$0xff] %v613
      %879 = vst [vmem:[%s205 + $0x2e8] sm:$0xff] %v615
      %880 = vst [vmem:[%s205 + $0x2f0] sm:$0xff] %v774
      %881 = vst [vmem:[%s205 + $0x2f8] sm:$0xff] %v776
      %882 = vst [vmem:[%s205 + $0x300] sm:$0xf] %v619
      %883 = vst [vmem:[%s205 + $0x308] sm:$0xf] %v621
      %884 = vst [vmem:[%s205 + $0x310] sm:$0xf] %v780
      %885 = vst [vmem:[%s205 + $0x318] sm:$0xf] %v782
      %v886 = vld [vmem:[%s200] sm:$0xff]
      %v887 = vld [vmem:[%s200 + $0x8] sm:$0x3f]
      %v888 = vld [vmem:[%s200 + $0xe] sm:$0xff]
      %v889 = vld [vmem:[%s200 + $0x16] sm:$0x3f]
      %v890 = vmax.f32 %v886, %v888
      %v891 = vmax.f32 %v887, %v889
      %v893 = vrot.slane %v890, 1
      %v895 = vmax.f32 %v890, %v893
      %896 = vst [vmem:[%s210] sm:$0x1] %v895
      %897 = vst [vmem:[%s210 - $0x1] sm:$0x4] %v895
      %898 = vst [vmem:[%s210 - $0x2] sm:$0x10] %v895
      %899 = vst [vmem:[%s210 - $0x3] sm:$0x40] %v895
      %v901 = vrot.slane %v891, 1
      %v903 = vmax.f32 %v891, %v901
      %904 = vst [vmem:[%s210 + $0x4] sm:$0x1] %v903
      %905 = vst [vmem:[%s210 + $0x3] sm:$0x4] %v903
      %906 = vst [vmem:[%s210 + $0x2] sm:$0x10] %v903
      %v907 = vld [vmem:[%s200 + $0x1c] sm:$0xff]
      %v908 = vld [vmem:[%s200 + $0x24] sm:$0x3f]
      %v909 = vld [vmem:[%s200 + $0x2a] sm:$0xff]
      %v910 = vld [vmem:[%s200 + $0x32] sm:$0x3f]
      %v911 = vmax.f32 %v907, %v909
      %v912 = vmax.f32 %v908, %v910
      %v914 = vrot.slane %v911, 1
      %v916 = vmax.f32 %v911, %v914
      %917 = vst [vmem:[%s210 + $0x7] sm:$0x1] %v916
      %918 = vst [vmem:[%s210 + $0x6] sm:$0x4] %v916
      %919 = vst [vmem:[%s210 + $0x5] sm:$0x10] %v916
      %920 = vst [vmem:[%s210 + $0x4] sm:$0x40] %v916
      %v922 = vrot.slane %v912, 1
      %v924 = vmax.f32 %v912, %v922
      %925 = vst [vmem:[%s210 + $0xb] sm:$0x1] %v924
      %926 = vst [vmem:[%s210 + $0xa] sm:$0x4] %v924
      %927 = vst [vmem:[%s210 + $0x9] sm:$0x10] %v924
      %v928 = vld [vmem:[%s200 + $0x38] sm:$0xff]
      %v929 = vld [vmem:[%s200 + $0x40] sm:$0x3f]
      %v930 = vld [vmem:[%s200 + $0x46] sm:$0xff]
      %v931 = vld [vmem:[%s200 + $0x4e] sm:$0x3f]
      %v932 = vmax.f32 %v928, %v930
      %v933 = vmax.f32 %v929, %v931
      %v935 = vrot.slane %v932, 1
      %v937 = vmax.f32 %v932, %v935
      %938 = vst [vmem:[%s210 + $0xe] sm:$0x1] %v937
      %939 = vst [vmem:[%s210 + $0xd] sm:$0x4] %v937
      %940 = vst [vmem:[%s210 + $0xc] sm:$0x10] %v937
      %941 = vst [vmem:[%s210 + $0xb] sm:$0x40] %v937
      %v943 = vrot.slane %v933, 1
      %v945 = vmax.f32 %v933, %v943
      %946 = vst [vmem:[%s210 + $0x12] sm:$0x1] %v945
      %947 = vst [vmem:[%s210 + $0x11] sm:$0x4] %v945
      %948 = vst [vmem:[%s210 + $0x10] sm:$0x10] %v945
      %v949 = vld [vmem:[%s200 + $0x54] sm:$0xff]
      %v950 = vld [vmem:[%s200 + $0x5c] sm:$0x3f]
      %v951 = vld [vmem:[%s200 + $0x62] sm:$0xff]
      %v952 = vld [vmem:[%s200 + $0x6a] sm:$0x3f]
      %v953 = vmax.f32 %v949, %v951
      %v954 = vmax.f32 %v950, %v952
      %v956 = vrot.slane %v953, 1
      %v958 = vmax.f32 %v953, %v956
      %959 = vst [vmem:[%s210 + $0x15] sm:$0x1] %v958
      %960 = vst [vmem:[%s210 + $0x14] sm:$0x4] %v958
      %961 = vst [vmem:[%s210 + $0x13] sm:$0x10] %v958
      %962 = vst [vmem:[%s210 + $0x12] sm:$0x40] %v958
      %v964 = vrot.slane %v954, 1
      %v966 = vmax.f32 %v954, %v964
      %967 = vst [vmem:[%s210 + $0x19] sm:$0x1] %v966
      %968 = vst [vmem:[%s210 + $0x18] sm:$0x4] %v966
      %969 = vst [vmem:[%s210 + $0x17] sm:$0x10] %v966
      %v970 = vld [vmem:[%s200 + $0x70] sm:$0xff]
      %v971 = vld [vmem:[%s200 + $0x78] sm:$0x3f]
      %v972 = vld [vmem:[%s200 + $0x7e] sm:$0xff]
      %v973 = vld [vmem:[%s200 + $0x86] sm:$0x3f]
      %v974 = vmax.f32 %v970, %v972
      %v975 = vmax.f32 %v971, %v973
      %v977 = vrot.slane %v974, 1
      %v979 = vmax.f32 %v974, %v977
      %980 = vst [vmem:[%s210 + $0x1c] sm:$0x1] %v979
      %981 = vst [vmem:[%s210 + $0x1b] sm:$0x4] %v979
      %982 = vst [vmem:[%s210 + $0x1a] sm:$0x10] %v979
      %983 = vst [vmem:[%s210 + $0x19] sm:$0x40] %v979
      %v985 = vrot.slane %v975, 1
      %v987 = vmax.f32 %v975, %v985
      %988 = vst [vmem:[%s210 + $0x20] sm:$0x1] %v987
      %989 = vst [vmem:[%s210 + $0x1f] sm:$0x4] %v987
      %990 = vst [vmem:[%s210 + $0x1e] sm:$0x10] %v987
      %v991 = vld [vmem:[%s200 + $0x8c] sm:$0xff]
      %v992 = vld [vmem:[%s200 + $0x94] sm:$0x3f]
      %v993 = vld [vmem:[%s200 + $0x9a] sm:$0xff]
      %v994 = vld [vmem:[%s200 + $0xa2] sm:$0x3f]
      %v995 = vmax.f32 %v991, %v993
      %v996 = vmax.f32 %v992, %v994
      %v998 = vrot.slane %v995, 1
      %v1000 = vmax.f32 %v995, %v998
      %1001 = vst [vmem:[%s210 + $0x23] sm:$0x1] %v1000
      %1002 = vst [vmem:[%s210 + $0x22] sm:$0x4] %v1000
      %1003 = vst [vmem:[%s210 + $0x21] sm:$0x10] %v1000
      %1004 = vst [vmem:[%s210 + $0x20] sm:$0x40] %v1000
      %v1006 = vrot.slane %v996, 1
      %v1008 = vmax.f32 %v996, %v1006
      %1009 = vst [vmem:[%s210 + $0x27] sm:$0x1] %v1008
      %1010 = vst [vmem:[%s210 + $0x26] sm:$0x4] %v1008
      %1011 = vst [vmem:[%s210 + $0x25] sm:$0x10] %v1008
      %v1012 = vld [vmem:[%s200 + $0xa8] sm:$0xff]
      %v1013 = vld [vmem:[%s200 + $0xb0] sm:$0x3f]
      %v1014 = vld [vmem:[%s200 + $0xb6] sm:$0xff]
      %v1015 = vld [vmem:[%s200 + $0xbe] sm:$0x3f]
      %v1016 = vmax.f32 %v1012, %v1014
      %v1017 = vmax.f32 %v1013, %v1015
      %v1019 = vrot.slane %v1016, 1
      %v1021 = vmax.f32 %v1016, %v1019
      %1022 = vst [vmem:[%s210 + $0x2a] sm:$0x1] %v1021
      %1023 = vst [vmem:[%s210 + $0x29] sm:$0x4] %v1021
      %1024 = vst [vmem:[%s210 + $0x28] sm:$0x10] %v1021
      %1025 = vst [vmem:[%s210 + $0x27] sm:$0x40] %v1021
      %v1027 = vrot.slane %v1017, 1
      %v1029 = vmax.f32 %v1017, %v1027
      %1030 = vst [vmem:[%s210 + $0x2e] sm:$0x1] %v1029
      %1031 = vst [vmem:[%s210 + $0x2d] sm:$0x4] %v1029
      %1032 = vst [vmem:[%s210 + $0x2c] sm:$0x10] %v1029
      %p1033 = scmp.lt.s32.totalorder %s16, 1
      %s1034 = scalar_select %p1033, %s16, 1
      %s1035 = smul.addr %s1034, 100
      %s1036 = smul.addr %s1035, 8
      %s1037 = scalar_lea.vmem %s3, %s1036
      %p1038 = scmp.lt.s32.totalorder %s16, 1
      %s1039 = scalar_select %p1038, %s16, 1
      %s1040 = smul.addr %s1039, 7
      %s1041 = smul.addr %s1040, 8
      %s1042 = scalar_lea.vmem %s4, %s1041
      // Predicated region
      $region33: #{tpu_custom_call.1} parent=31 // pred_check
        %p1043 = pneg %p102
      $region34: #{tpu_custom_call.1} parent=31 // pred_check_branch
        %1045 = sbr.rel (%p1043) target = $region36
      $region35: #{tpu_custom_call.1} parent=31 // pred_region
        _
      $region36: #{tpu_custom_call.1} parent=31 // pred_fallthru
        _
      // Predicated region
      $region37: #{tpu_custom_call.1} parent=31 // pred_check
        %p1046 = pneg %p128
      $region38: #{tpu_custom_call.1} parent=31 // pred_check_branch
        %1048 = sbr.rel (%p1046) target = $region40
      $region39: #{tpu_custom_call.1} parent=31 // pred_region
        _
      $region40: #{tpu_custom_call.1} parent=31 // pred_fallthru
        _
    $region32: #{tpu_custom_call.1} parent=5 // pred_fallthru
      _
    %p1049 = scmp.le.s32.totalorder 2, %s11
    // Predicated region
    $region41: #{tpu_custom_call.1} parent=5 // pred_check
      %p1050 = pneg %p1049
    $region42: #{tpu_custom_call.1} parent=5 // pred_check_branch
      %1052 = sbr.rel (%p1050) target = $region44
    $region43: #{tpu_custom_call.1} parent=5 // pred_region
      %s1053 = ssub.s32 %s11, 2
      // Predicated region
      $region45: #{tpu_custom_call.1} parent=43 // pred_check
        %p1054 = pneg %p108
      $region46: #{tpu_custom_call.1} parent=43 // pred_check_branch
        %1056 = sbr.rel (%p1054) target = $region48
      $region47: #{tpu_custom_call.1} parent=43 // pred_region
        %p1057 = scmp.lt.s32.totalorder %s17, 1
        %s1058 = scalar_select %p1057, %s17, 1
        %s1059 = smul.addr %s1058, 100
        %s1060 = smul.addr %s1059, 8
        %s1061 = scalar_lea.vmem %s3, %s1060
      $region48: #{tpu_custom_call.1} parent=43 // pred_fallthru
        _
      // Predicated region
      $region49: #{tpu_custom_call.1} parent=43 // pred_check
        %p1062 = pneg %p134
      $region50: #{tpu_custom_call.1} parent=43 // pred_check_branch
        %1064 = sbr.rel (%p1062) target = $region52
      $region51: #{tpu_custom_call.1} parent=43 // pred_region
        %p1065 = scmp.lt.s32.totalorder %s17, 1
        %s1066 = scalar_select %p1065, %s17, 1
        %s1067 = smul.addr %s1066, 7
        %s1068 = smul.addr %s1067, 8
        %s1069 = scalar_lea.vmem %s4, %s1068
      $region52: #{tpu_custom_call.1} parent=43 // pred_fallthru
        _
    $region44: #{tpu_custom_call.1} parent=5 // pred_fallthru
      _
  $region6: #{tpu_custom_call.1} parent=0 // loop_footer
    %s15 = sadd.s32 1, %s11
  $region7: #{tpu_custom_call.1} parent=0 // loop_footer_branch
    %10 = sbr.rel target = $region3
  $region8: #{tpu_custom_call.1} parent=0 // loop_exit
    _

</llo_original>
